<compile_context>
chip_gen: v6e
topology: v6e:2x2x1
jax: 0.10.0
libtpu: 0.0.40
codegen_flags: <defaults>
</compile_context>

<pallas_src>
from functools import partial

import jax
import jax.numpy as jnp
from jax.experimental import pallas as pl
from jax.experimental.pallas import tpu as pltpu

EPS = 1e-5                    # nn.BatchNorm1d default eps
LANE = 128                    # lane-axis padding target for hidden widths
WEIGHT_DTYPE = jnp.bfloat16   # MXU operand dtype; accumulation stays f32


# ----------------------------- fused Pallas kernel -----------------------------

def _make_fused_mlp_kernel(n_bn):
    """Whole network in one kernel body, layers unrolled (straight-line code).

    x_ref : (B, nf) f32        w0_ref : (nf, LANE) bf16
    w_ref : (n_bn, LANE, LANE) bf16 (BN layers 1..n_bn-1 + final Linear)
    vec_ref: (rows, LANE) f32  (rows [0,n_bn)=gamma, [n_bn,2n_bn)=beta,
                                row 2n_bn = final Linear bias)
    o_ref : (B, LANE) f32
    """

    def kernel(x_ref, w0_ref, w_ref, vec_ref, o_ref):
        def linear(h, w_bf16):
            # bf16 operands into the MXU, f32 accumulation.
            return jnp.dot(h.astype(WEIGHT_DTYPE), w_bf16,
                           preferred_element_type=jnp.float32)

        def bn_relu(y, l):
            # Two independent cross-sublane reductions (overlap in the XLU).
            mean = jnp.mean(y, axis=0, keepdims=True)             # (1, LANE)
            mean_sq = jnp.mean(y * y, axis=0, keepdims=True)      # (1, LANE)
            var = jnp.maximum(mean_sq - mean * mean, 0.0)         # clamp cancellation
            gamma = vec_ref[l:l + 1, :]
            beta = vec_ref[n_bn + l:n_bn + l + 1, :]
            scale = gamma * jax.lax.rsqrt(var + EPS)              # (1, LANE)
            shift = beta - mean * scale                           # (1, LANE)
            # Padded lanes: gamma=beta=0 -> scale=shift=0 -> stay exactly 0.
            return jnp.maximum(y * scale + shift, 0.0)

        h = bn_relu(linear(x_ref[...], w0_ref[...]), 0)           # first layer: K = nf
        # TODO(synk): switch to lax.fori_loop with dynamic w_ref[l] indexing if
        # bundle dumps ever show spill vst from this unroll (bf16 weights keep
        # each hoisted layer at ~8 vregs; activations are 1 vreg).
        for l in range(1, n_bn):
            h = bn_relu(linear(h, w_ref[l - 1]), l)
        yf = linear(h, w_ref[n_bn - 1])                           # final Linear
        o_ref[...] = yf + vec_ref[2 * n_bn:2 * n_bn + 1, :]       # + final bias

    return kernel


# ------------------------------ parameter packing -------------------------------

def layer_dims(num_features, init_param):
    p = init_param
    return [num_features, p, p, p, p // 2, p // 4, p // 8,
            p // 16, p // 32, p // 64, p // 64]


def init_params(key, num_features, init_param):
    """PyTorch-like defaults: Linear U(-1/sqrt(fan_in), 1/sqrt(fan_in)); BN gamma=1, beta=0."""
    dims = layer_dims(num_features, init_param)
    layers = []
    for i in range(len(dims) - 1):
        fan_in, fan_out = dims[i], dims[i + 1]
        key, kw, kb = jax.random.split(key, 3)
        bound = 1.0 / (fan_in ** 0.5)
        w = jax.random.uniform(kw, (fan_in, fan_out), jnp.float32, -bound, bound)
        b = jax.random.uniform(kb, (1, fan_out), jnp.float32, -bound, bound)
        gamma = jnp.ones((1, fan_out), jnp.float32)
        beta = jnp.zeros((1, fan_out), jnp.float32)
        layers.append((w, b, gamma, beta))
    fan_in, fan_out = dims[-1], 2
    key, kw, kb = jax.random.split(key, 3)
    bound = 1.0 / (fan_in ** 0.5)
    wf = jax.random.uniform(kw, (fan_in, fan_out), jnp.float32, -bound, bound)
    bf = jax.random.uniform(kb, (1, fan_out), jnp.float32, -bound, bound)
    return layers, (wf, bf)


def pack_params(layers, final, pad=LANE, weight_dtype=WEIGHT_DTYPE):
    """One-time packing.

    W0: (nf, pad) bf16 (first Linear, natural fan_in, fan_out lane-padded)
    W : (n_bn, pad, pad) bf16 (BN layers 1..n_bn-1 + final Linear, zero-padded)
    V : (rows, pad) f32 (gammas / betas / final bias; padded lanes stay 0)
    Note: the BN-layer Linear biases are intentionally not packed -- they cancel
    inside training-mode BatchNorm.
    """
    n_bn = len(layers)
    wf, bf = final
    assert all(w.shape[1] <= pad for (w, _b, _g, _bt) in layers) and wf.shape[1] <= pad
    assert all(w.shape[0] <= pad for (w, _b, _g, _bt) in layers[1:]) and wf.shape[0] <= pad

    w0 = layers[0][0]
    W0 = jnp.zeros((w0.shape[0], pad), jnp.float32).at[:, :w0.shape[1]].set(w0)
    W0 = W0.astype(weight_dtype)

    w_stack = []
    for (w, _b, _g, _bt) in layers[1:]:
        wp = jnp.zeros((pad, pad), jnp.float32).at[:w.shape[0], :w.shape[1]].set(w)
        w_stack.append(wp)
    wfp = jnp.zeros((pad, pad), jnp.float32).at[:wf.shape[0], :wf.shape[1]].set(wf)
    w_stack.append(wfp)
    W = jnp.stack(w_stack).astype(weight_dtype)                   # (n_bn, pad, pad)

    n_rows = -(-(2 * n_bn + 1) // 8) * 8                          # sublane multiple
    V = jnp.zeros((n_rows, pad), jnp.float32)
    for l, (_w, _b, g, bt) in enumerate(layers):
        V = V.at[l, :g.shape[-1]].set(g.reshape(-1))
        V = V.at[n_bn + l, :bt.shape[-1]].set(bt.reshape(-1))
    V = V.at[2 * n_bn, :bf.shape[-1]].set(bf.reshape(-1))
    return W0, W, V


# ----------------------------------- forward ------------------------------------

@partial(jax.jit, static_argnames=("n_bn", "out_dim"))
def baseline_classifier_forward(x, W0, W, V, *, n_bn, out_dim):
    """One batch, single invocation, no grid (BN statistics over the full batch)."""
    B, _nf = x.shape
    pad = W.shape[-1]
    vmem = pl.BlockSpec(memory_space=pltpu.MemorySpace.VMEM)
    out = pl.pallas_call(
        _make_fused_mlp_kernel(n_bn),
        out_shape=jax.ShapeDtypeStruct((B, pad), jnp.float32),
        in_specs=[vmem, vmem, vmem, vmem],
        out_specs=vmem,
    )(x, W0, W, V)
    return out[:, :out_dim]


@partial(jax.jit, static_argnames=("n_bn", "out_dim"))
def baseline_classifier_forward_batched(xs, W0, W, V, *, n_bn, out_dim):
    """Throughput path: G independent batches (each gets its own BN statistics).

    Weights/vectors use constant index_maps -> DMA'd once, VMEM-resident across
    all grid steps; x/out blocks pipeline under compute.  The batch axis is
    "parallel" so v7x shards it across both TensorCores (no-op on v5e/v6e).
    """
    G, B, nf = xs.shape
    n_w, pad, _ = W.shape
    rows = V.shape[0]
    out = pl.pallas_call(
        _make_fused_mlp_kernel(n_bn),
        out_shape=jax.ShapeDtypeStruct((G, B, pad), jnp.float32),
        grid=(G,),
        in_specs=[
            pl.BlockSpec((pl.Squeezed(), B, nf), lambda g: (g, 0, 0)),
            pl.BlockSpec((nf, pad), lambda g: (0, 0)),
            pl.BlockSpec((n_w, pad, pad), lambda g: (0, 0, 0)),
            pl.BlockSpec((rows, pad), lambda g: (0, 0)),
        ],
        out_specs=pl.BlockSpec((pl.Squeezed(), B, pad), lambda g: (g, 0, 0)),
        compiler_params=pltpu.CompilerParams(dimension_semantics=("parallel",)),
    )(xs, W0, W, V)
    return out[..., :out_dim]


# ------------------------------ pure-JAX reference -------------------------------

def baseline_classifier_ref(x, layers, final, compute_dtype=WEIGHT_DTYPE):
    """Matches the PyTorch module (biases included, standard train-mode BN form),
    with the kernel's bf16 MXU-operand choice mirrored so the comparison checks
    kernel logic rather than the deliberate bf16 precision tradeoff."""
    h = x
    for (w, b, gamma, beta) in layers:
        y = jnp.dot(h.astype(compute_dtype), w.astype(compute_dtype),
                    preferred_element_type=jnp.float32) + b
        mean = jnp.mean(y, axis=0, keepdims=True)
        var = jnp.mean((y - mean) ** 2, axis=0, keepdims=True)
        y = (y - mean) * jax.lax.rsqrt(var + EPS) * gamma + beta
        h = jnp.maximum(y, 0.0)
    wf, bf = final
    return jnp.dot(h.astype(compute_dtype), wf.astype(compute_dtype),
                   preferred_element_type=jnp.float32) + bf


if __name__ == "__main__":
    NUM_FEATURES = 32
    INIT_PARAM = 128   # hidden widths: 128,128,128,64,32,16,8,4,2,2 -> 2
    BATCH = 8          # BN statistics over the full batch; must be a multiple of 8
    N_BATCHES = 4      # independent batches for the grid/throughput path

    key = jax.random.PRNGKey(0)
    key, kx = jax.random.split(key)
    xs = jax.random.normal(kx, (N_BATCHES, BATCH, NUM_FEATURES), jnp.float32)

    layers, final = init_params(key, NUM_FEATURES, INIT_PARAM)
    W0, W, V = pack_params(layers, final)
    n_bn = len(layers)

    # single-batch, single-invocation path
    out1 = baseline_classifier_forward(xs[0], W0, W, V, n_bn=n_bn, out_dim=2)
    out1 = jax.block_until_ready(out1)
    ref1 = baseline_classifier_ref(xs[0], layers, final)
    assert out1.shape == (BATCH, 2)
    assert jnp.allclose(out1, ref1, atol=2e-2, rtol=2e-2), "single-batch mismatch vs reference"

    # multi-batch throughput path (grid over independent batches, weights resident)
    outG = baseline_classifier_forward_batched(xs, W0, W, V, n_bn=n_bn, out_dim=2)
    outG = jax.block_until_ready(outG)
    assert outG.shape == (N_BATCHES, BATCH, 2)
    for g in range(N_BATCHES):
        refg = baseline_classifier_ref(xs[g], layers, final)
        assert jnp.allclose(outG[g], refg, atol=2e-2, rtol=2e-2), f"batch {g} mismatch vs reference"

    print("KERNEL_OK")
</pallas_src>

<mosaic_0001>
module attributes {stable_mosaic.version = 11 : i64} {
  func.func @kernel(%arg0: memref<8x32xf32, #tpu.memory_space<vmem>>, %arg1: memref<32x128xbf16, #tpu.memory_space<vmem>>, %arg2: memref<10x128x128xbf16, #tpu.memory_space<vmem>>, %arg3: memref<24x128xf32, #tpu.memory_space<vmem>>, %arg4: memref<8x128xf32, #tpu.memory_space<vmem>>) attributes {dimension_semantics = [], scalar_prefetch = 0 : i64, scratch_operands = 0 : i64, tpu.core_type = #tpu.core_type<tc>} {
    %c0 = arith.constant 0 : index
    %c0_0 = arith.constant 0 : index
    %0 = vector.load %arg0[%c0, %c0_0] : memref<8x32xf32, #tpu.memory_space<vmem>>, vector<8x32xf32>
    %c0_1 = arith.constant 0 : index
    %c0_2 = arith.constant 0 : index
    %1 = vector.load %arg1[%c0_1, %c0_2] : memref<32x128xbf16, #tpu.memory_space<vmem>>, vector<32x128xbf16>
    %2 = arith.truncf %0 : vector<8x32xf32> to vector<8x32xbf16>
    %cst = arith.constant dense<0.000000e+00> : vector<8x128xf32>
    %3 = tpu.matmul %2, %1, %cst {dimension_numbers = #tpu.dot_dimension_numbers<[1], [0], [0], [1], [0, 0, 1, 1], [], []>} : vector<8x32xbf16>, vector<32x128xbf16>, vector<8x128xf32> -> vector<8x128xf32>
    %cst_3 = arith.constant dense<0.000000e+00> : vector<128xf32>
    %4 = vector.multi_reduction <add>, %3, %cst_3 [0] : vector<8x128xf32> to vector<128xf32>
    %5 = vector.shape_cast %4 : vector<128xf32> to vector<1x128xf32>
    %cst_4 = arith.constant 8.000000e+00 : f32
    %6 = vector.broadcast %cst_4 : f32 to vector<1x128xf32>
    %7 = arith.divf %5, %6 : vector<1x128xf32>
    %8 = arith.mulf %3, %3 : vector<8x128xf32>
    %cst_5 = arith.constant dense<0.000000e+00> : vector<128xf32>
    %9 = vector.multi_reduction <add>, %8, %cst_5 [0] : vector<8x128xf32> to vector<128xf32>
    %10 = vector.shape_cast %9 : vector<128xf32> to vector<1x128xf32>
    %cst_6 = arith.constant 8.000000e+00 : f32
    %11 = vector.broadcast %cst_6 : f32 to vector<1x128xf32>
    %12 = arith.divf %10, %11 : vector<1x128xf32>
    %13 = arith.mulf %7, %7 : vector<1x128xf32>
    %14 = arith.subf %12, %13 : vector<1x128xf32>
    %cst_7 = arith.constant 0.000000e+00 : f32
    %15 = vector.broadcast %cst_7 : f32 to vector<1x128xf32>
    %16 = arith.maximumf %14, %15 : vector<1x128xf32>
    %c0_8 = arith.constant 0 : index
    %c0_9 = arith.constant 0 : index
    %17 = vector.load %arg3[%c0_8, %c0_9] : memref<24x128xf32, #tpu.memory_space<vmem>>, vector<1x128xf32>
    %c10 = arith.constant 10 : index
    %c0_10 = arith.constant 0 : index
    %18 = vector.load %arg3[%c10, %c0_10] : memref<24x128xf32, #tpu.memory_space<vmem>>, vector<1x128xf32>
    %cst_11 = arith.constant 9.99999974E-6 : f32
    %19 = vector.broadcast %cst_11 : f32 to vector<1x128xf32>
    %20 = arith.addf %16, %19 : vector<1x128xf32>
    %21 = math.rsqrt %20 : vector<1x128xf32>
    %22 = arith.mulf %17, %21 : vector<1x128xf32>
    %23 = arith.mulf %7, %22 : vector<1x128xf32>
    %24 = arith.subf %18, %23 : vector<1x128xf32>
    %25 = vector.broadcast %22 : vector<1x128xf32> to vector<8x128xf32>
    %26 = arith.mulf %3, %25 : vector<8x128xf32>
    %27 = vector.broadcast %24 : vector<1x128xf32> to vector<8x128xf32>
    %28 = arith.addf %26, %27 : vector<8x128xf32>
    %cst_12 = arith.constant 0.000000e+00 : f32
    %29 = vector.broadcast %cst_12 : f32 to vector<8x128xf32>
    %30 = arith.maximumf %28, %29 : vector<8x128xf32>
    %c0_13 = arith.constant 0 : index
    %c0_14 = arith.constant 0 : index
    %c0_15 = arith.constant 0 : index
    %31 = vector.load %arg2[%c0_13, %c0_14, %c0_15] : memref<10x128x128xbf16, #tpu.memory_space<vmem>>, vector<1x128x128xbf16>
    %32 = vector.shape_cast %31 : vector<1x128x128xbf16> to vector<128x128xbf16>
    %33 = arith.truncf %30 : vector<8x128xf32> to vector<8x128xbf16>
    %cst_16 = arith.constant dense<0.000000e+00> : vector<8x128xf32>
    %34 = tpu.matmul %33, %32, %cst_16 {dimension_numbers = #tpu.dot_dimension_numbers<[1], [0], [0], [1], [0, 0, 1, 1], [], []>} : vector<8x128xbf16>, vector<128x128xbf16>, vector<8x128xf32> -> vector<8x128xf32>
    %cst_17 = arith.constant dense<0.000000e+00> : vector<128xf32>
    %35 = vector.multi_reduction <add>, %34, %cst_17 [0] : vector<8x128xf32> to vector<128xf32>
    %36 = vector.shape_cast %35 : vector<128xf32> to vector<1x128xf32>
    %cst_18 = arith.constant 8.000000e+00 : f32
    %37 = vector.broadcast %cst_18 : f32 to vector<1x128xf32>
    %38 = arith.divf %36, %37 : vector<1x128xf32>
    %39 = arith.mulf %34, %34 : vector<8x128xf32>
    %cst_19 = arith.constant dense<0.000000e+00> : vector<128xf32>
    %40 = vector.multi_reduction <add>, %39, %cst_19 [0] : vector<8x128xf32> to vector<128xf32>
    %41 = vector.shape_cast %40 : vector<128xf32> to vector<1x128xf32>
    %cst_20 = arith.constant 8.000000e+00 : f32
    %42 = vector.broadcast %cst_20 : f32 to vector<1x128xf32>
    %43 = arith.divf %41, %42 : vector<1x128xf32>
    %44 = arith.mulf %38, %38 : vector<1x128xf32>
    %45 = arith.subf %43, %44 : vector<1x128xf32>
    %cst_21 = arith.constant 0.000000e+00 : f32
    %46 = vector.broadcast %cst_21 : f32 to vector<1x128xf32>
    %47 = arith.maximumf %45, %46 : vector<1x128xf32>
    %c1 = arith.constant 1 : index
    %c0_22 = arith.constant 0 : index
    %48 = vector.load %arg3[%c1, %c0_22] : memref<24x128xf32, #tpu.memory_space<vmem>>, vector<1x128xf32>
    %c11 = arith.constant 11 : index
    %c0_23 = arith.constant 0 : index
    %49 = vector.load %arg3[%c11, %c0_23] : memref<24x128xf32, #tpu.memory_space<vmem>>, vector<1x128xf32>
    %cst_24 = arith.constant 9.99999974E-6 : f32
    %50 = vector.broadcast %cst_24 : f32 to vector<1x128xf32>
    %51 = arith.addf %47, %50 : vector<1x128xf32>
    %52 = math.rsqrt %51 : vector<1x128xf32>
    %53 = arith.mulf %48, %52 : vector<1x128xf32>
    %54 = arith.mulf %38, %53 : vector<1x128xf32>
    %55 = arith.subf %49, %54 : vector<1x128xf32>
    %56 = vector.broadcast %53 : vector<1x128xf32> to vector<8x128xf32>
    %57 = arith.mulf %34, %56 : vector<8x128xf32>
    %58 = vector.broadcast %55 : vector<1x128xf32> to vector<8x128xf32>
    %59 = arith.addf %57, %58 : vector<8x128xf32>
    %cst_25 = arith.constant 0.000000e+00 : f32
    %60 = vector.broadcast %cst_25 : f32 to vector<8x128xf32>
    %61 = arith.maximumf %59, %60 : vector<8x128xf32>
    %c1_26 = arith.constant 1 : index
    %c0_27 = arith.constant 0 : index
    %c0_28 = arith.constant 0 : index
    %62 = vector.load %arg2[%c1_26, %c0_27, %c0_28] : memref<10x128x128xbf16, #tpu.memory_space<vmem>>, vector<1x128x128xbf16>
    %63 = vector.shape_cast %62 : vector<1x128x128xbf16> to vector<128x128xbf16>
    %64 = arith.truncf %61 : vector<8x128xf32> to vector<8x128xbf16>
    %cst_29 = arith.constant dense<0.000000e+00> : vector<8x128xf32>
    %65 = tpu.matmul %64, %63, %cst_29 {dimension_numbers = #tpu.dot_dimension_numbers<[1], [0], [0], [1], [0, 0, 1, 1], [], []>} : vector<8x128xbf16>, vector<128x128xbf16>, vector<8x128xf32> -> vector<8x128xf32>
    %cst_30 = arith.constant dense<0.000000e+00> : vector<128xf32>
    %66 = vector.multi_reduction <add>, %65, %cst_30 [0] : vector<8x128xf32> to vector<128xf32>
    %67 = vector.shape_cast %66 : vector<128xf32> to vector<1x128xf32>
    %cst_31 = arith.constant 8.000000e+00 : f32
    %68 = vector.broadcast %cst_31 : f32 to vector<1x128xf32>
    %69 = arith.divf %67, %68 : vector<1x128xf32>
    %70 = arith.mulf %65, %65 : vector<8x128xf32>
    %cst_32 = arith.constant dense<0.000000e+00> : vector<128xf32>
    %71 = vector.multi_reduction <add>, %70, %cst_32 [0] : vector<8x128xf32> to vector<128xf32>
    %72 = vector.shape_cast %71 : vector<128xf32> to vector<1x128xf32>
    %cst_33 = arith.constant 8.000000e+00 : f32
    %73 = vector.broadcast %cst_33 : f32 to vector<1x128xf32>
    %74 = arith.divf %72, %73 : vector<1x128xf32>
    %75 = arith.mulf %69, %69 : vector<1x128xf32>
    %76 = arith.subf %74, %75 : vector<1x128xf32>
    %cst_34 = arith.constant 0.000000e+00 : f32
    %77 = vector.broadcast %cst_34 : f32 to vector<1x128xf32>
    %78 = arith.maximumf %76, %77 : vector<1x128xf32>
    %c2 = arith.constant 2 : index
    %c0_35 = arith.constant 0 : index
    %79 = vector.load %arg3[%c2, %c0_35] : memref<24x128xf32, #tpu.memory_space<vmem>>, vector<1x128xf32>
    %c12 = arith.constant 12 : index
    %c0_36 = arith.constant 0 : index
    %80 = vector.load %arg3[%c12, %c0_36] : memref<24x128xf32, #tpu.memory_space<vmem>>, vector<1x128xf32>
    %cst_37 = arith.constant 9.99999974E-6 : f32
    %81 = vector.broadcast %cst_37 : f32 to vector<1x128xf32>
    %82 = arith.addf %78, %81 : vector<1x128xf32>
    %83 = math.rsqrt %82 : vector<1x128xf32>
    %84 = arith.mulf %79, %83 : vector<1x128xf32>
    %85 = arith.mulf %69, %84 : vector<1x128xf32>
    %86 = arith.subf %80, %85 : vector<1x128xf32>
    %87 = vector.broadcast %84 : vector<1x128xf32> to vector<8x128xf32>
    %88 = arith.mulf %65, %87 : vector<8x128xf32>
    %89 = vector.broadcast %86 : vector<1x128xf32> to vector<8x128xf32>
    %90 = arith.addf %88, %89 : vector<8x128xf32>
    %cst_38 = arith.constant 0.000000e+00 : f32
    %91 = vector.broadcast %cst_38 : f32 to vector<8x128xf32>
    %92 = arith.maximumf %90, %91 : vector<8x128xf32>
    %c2_39 = arith.constant 2 : index
    %c0_40 = arith.constant 0 : index
    %c0_41 = arith.constant 0 : index
    %93 = vector.load %arg2[%c2_39, %c0_40, %c0_41] : memref<10x128x128xbf16, #tpu.memory_space<vmem>>, vector<1x128x128xbf16>
    %94 = vector.shape_cast %93 : vector<1x128x128xbf16> to vector<128x128xbf16>
    %95 = arith.truncf %92 : vector<8x128xf32> to vector<8x128xbf16>
    %cst_42 = arith.constant dense<0.000000e+00> : vector<8x128xf32>
    %96 = tpu.matmul %95, %94, %cst_42 {dimension_numbers = #tpu.dot_dimension_numbers<[1], [0], [0], [1], [0, 0, 1, 1], [], []>} : vector<8x128xbf16>, vector<128x128xbf16>, vector<8x128xf32> -> vector<8x128xf32>
    %cst_43 = arith.constant dense<0.000000e+00> : vector<128xf32>
    %97 = vector.multi_reduction <add>, %96, %cst_43 [0] : vector<8x128xf32> to vector<128xf32>
    %98 = vector.shape_cast %97 : vector<128xf32> to vector<1x128xf32>
    %cst_44 = arith.constant 8.000000e+00 : f32
    %99 = vector.broadcast %cst_44 : f32 to vector<1x128xf32>
    %100 = arith.divf %98, %99 : vector<1x128xf32>
    %101 = arith.mulf %96, %96 : vector<8x128xf32>
    %cst_45 = arith.constant dense<0.000000e+00> : vector<128xf32>
    %102 = vector.multi_reduction <add>, %101, %cst_45 [0] : vector<8x128xf32> to vector<128xf32>
    %103 = vector.shape_cast %102 : vector<128xf32> to vector<1x128xf32>
    %cst_46 = arith.constant 8.000000e+00 : f32
    %104 = vector.broadcast %cst_46 : f32 to vector<1x128xf32>
    %105 = arith.divf %103, %104 : vector<1x128xf32>
    %106 = arith.mulf %100, %100 : vector<1x128xf32>
    %107 = arith.subf %105, %106 : vector<1x128xf32>
    %cst_47 = arith.constant 0.000000e+00 : f32
    %108 = vector.broadcast %cst_47 : f32 to vector<1x128xf32>
    %109 = arith.maximumf %107, %108 : vector<1x128xf32>
    %c3 = arith.constant 3 : index
    %c0_48 = arith.constant 0 : index
    %110 = vector.load %arg3[%c3, %c0_48] : memref<24x128xf32, #tpu.memory_space<vmem>>, vector<1x128xf32>
    %c13 = arith.constant 13 : index
    %c0_49 = arith.constant 0 : index
    %111 = vector.load %arg3[%c13, %c0_49] : memref<24x128xf32, #tpu.memory_space<vmem>>, vector<1x128xf32>
    %cst_50 = arith.constant 9.99999974E-6 : f32
    %112 = vector.broadcast %cst_50 : f32 to vector<1x128xf32>
    %113 = arith.addf %109, %112 : vector<1x128xf32>
    %114 = math.rsqrt %113 : vector<1x128xf32>
    %115 = arith.mulf %110, %114 : vector<1x128xf32>
    %116 = arith.mulf %100, %115 : vector<1x128xf32>
    %117 = arith.subf %111, %116 : vector<1x128xf32>
    %118 = vector.broadcast %115 : vector<1x128xf32> to vector<8x128xf32>
    %119 = arith.mulf %96, %118 : vector<8x128xf32>
    %120 = vector.broadcast %117 : vector<1x128xf32> to vector<8x128xf32>
    %121 = arith.addf %119, %120 : vector<8x128xf32>
    %cst_51 = arith.constant 0.000000e+00 : f32
    %122 = vector.broadcast %cst_51 : f32 to vector<8x128xf32>
    %123 = arith.maximumf %121, %122 : vector<8x128xf32>
    %c3_52 = arith.constant 3 : index
    %c0_53 = arith.constant 0 : index
    %c0_54 = arith.constant 0 : index
    %124 = vector.load %arg2[%c3_52, %c0_53, %c0_54] : memref<10x128x128xbf16, #tpu.memory_space<vmem>>, vector<1x128x128xbf16>
    %125 = vector.shape_cast %124 : vector<1x128x128xbf16> to vector<128x128xbf16>
    %126 = arith.truncf %123 : vector<8x128xf32> to vector<8x128xbf16>
    %cst_55 = arith.constant dense<0.000000e+00> : vector<8x128xf32>
    %127 = tpu.matmul %126, %125, %cst_55 {dimension_numbers = #tpu.dot_dimension_numbers<[1], [0], [0], [1], [0, 0, 1, 1], [], []>} : vector<8x128xbf16>, vector<128x128xbf16>, vector<8x128xf32> -> vector<8x128xf32>
    %cst_56 = arith.constant dense<0.000000e+00> : vector<128xf32>
    %128 = vector.multi_reduction <add>, %127, %cst_56 [0] : vector<8x128xf32> to vector<128xf32>
    %129 = vector.shape_cast %128 : vector<128xf32> to vector<1x128xf32>
    %cst_57 = arith.constant 8.000000e+00 : f32
    %130 = vector.broadcast %cst_57 : f32 to vector<1x128xf32>
    %131 = arith.divf %129, %130 : vector<1x128xf32>
    %132 = arith.mulf %127, %127 : vector<8x128xf32>
    %cst_58 = arith.constant dense<0.000000e+00> : vector<128xf32>
    %133 = vector.multi_reduction <add>, %132, %cst_58 [0] : vector<8x128xf32> to vector<128xf32>
    %134 = vector.shape_cast %133 : vector<128xf32> to vector<1x128xf32>
    %cst_59 = arith.constant 8.000000e+00 : f32
    %135 = vector.broadcast %cst_59 : f32 to vector<1x128xf32>
    %136 = arith.divf %134, %135 : vector<1x128xf32>
    %137 = arith.mulf %131, %131 : vector<1x128xf32>
    %138 = arith.subf %136, %137 : vector<1x128xf32>
    %cst_60 = arith.constant 0.000000e+00 : f32
    %139 = vector.broadcast %cst_60 : f32 to vector<1x128xf32>
    %140 = arith.maximumf %138, %139 : vector<1x128xf32>
    %c4 = arith.constant 4 : index
    %c0_61 = arith.constant 0 : index
    %141 = vector.load %arg3[%c4, %c0_61] : memref<24x128xf32, #tpu.memory_space<vmem>>, vector<1x128xf32>
    %c14 = arith.constant 14 : index
    %c0_62 = arith.constant 0 : index
    %142 = vector.load %arg3[%c14, %c0_62] : memref<24x128xf32, #tpu.memory_space<vmem>>, vector<1x128xf32>
    %cst_63 = arith.constant 9.99999974E-6 : f32
    %143 = vector.broadcast %cst_63 : f32 to vector<1x128xf32>
    %144 = arith.addf %140, %143 : vector<1x128xf32>
    %145 = math.rsqrt %144 : vector<1x128xf32>
    %146 = arith.mulf %141, %145 : vector<1x128xf32>
    %147 = arith.mulf %131, %146 : vector<1x128xf32>
    %148 = arith.subf %142, %147 : vector<1x128xf32>
    %149 = vector.broadcast %146 : vector<1x128xf32> to vector<8x128xf32>
    %150 = arith.mulf %127, %149 : vector<8x128xf32>
    %151 = vector.broadcast %148 : vector<1x128xf32> to vector<8x128xf32>
    %152 = arith.addf %150, %151 : vector<8x128xf32>
    %cst_64 = arith.constant 0.000000e+00 : f32
    %153 = vector.broadcast %cst_64 : f32 to vector<8x128xf32>
    %154 = arith.maximumf %152, %153 : vector<8x128xf32>
    %c4_65 = arith.constant 4 : index
    %c0_66 = arith.constant 0 : index
    %c0_67 = arith.constant 0 : index
    %155 = vector.load %arg2[%c4_65, %c0_66, %c0_67] : memref<10x128x128xbf16, #tpu.memory_space<vmem>>, vector<1x128x128xbf16>
    %156 = vector.shape_cast %155 : vector<1x128x128xbf16> to vector<128x128xbf16>
    %157 = arith.truncf %154 : vector<8x128xf32> to vector<8x128xbf16>
    %cst_68 = arith.constant dense<0.000000e+00> : vector<8x128xf32>
    %158 = tpu.matmul %157, %156, %cst_68 {dimension_numbers = #tpu.dot_dimension_numbers<[1], [0], [0], [1], [0, 0, 1, 1], [], []>} : vector<8x128xbf16>, vector<128x128xbf16>, vector<8x128xf32> -> vector<8x128xf32>
    %cst_69 = arith.constant dense<0.000000e+00> : vector<128xf32>
    %159 = vector.multi_reduction <add>, %158, %cst_69 [0] : vector<8x128xf32> to vector<128xf32>
    %160 = vector.shape_cast %159 : vector<128xf32> to vector<1x128xf32>
    %cst_70 = arith.constant 8.000000e+00 : f32
    %161 = vector.broadcast %cst_70 : f32 to vector<1x128xf32>
    %162 = arith.divf %160, %161 : vector<1x128xf32>
    %163 = arith.mulf %158, %158 : vector<8x128xf32>
    %cst_71 = arith.constant dense<0.000000e+00> : vector<128xf32>
    %164 = vector.multi_reduction <add>, %163, %cst_71 [0] : vector<8x128xf32> to vector<128xf32>
    %165 = vector.shape_cast %164 : vector<128xf32> to vector<1x128xf32>
    %cst_72 = arith.constant 8.000000e+00 : f32
    %166 = vector.broadcast %cst_72 : f32 to vector<1x128xf32>
    %167 = arith.divf %165, %166 : vector<1x128xf32>
    %168 = arith.mulf %162, %162 : vector<1x128xf32>
    %169 = arith.subf %167, %168 : vector<1x128xf32>
    %cst_73 = arith.constant 0.000000e+00 : f32
    %170 = vector.broadcast %cst_73 : f32 to vector<1x128xf32>
    %171 = arith.maximumf %169, %170 : vector<1x128xf32>
    %c5 = arith.constant 5 : index
    %c0_74 = arith.constant 0 : index
    %172 = vector.load %arg3[%c5, %c0_74] : memref<24x128xf32, #tpu.memory_space<vmem>>, vector<1x128xf32>
    %c15 = arith.constant 15 : index
    %c0_75 = arith.constant 0 : index
    %173 = vector.load %arg3[%c15, %c0_75] : memref<24x128xf32, #tpu.memory_space<vmem>>, vector<1x128xf32>
    %cst_76 = arith.constant 9.99999974E-6 : f32
    %174 = vector.broadcast %cst_76 : f32 to vector<1x128xf32>
    %175 = arith.addf %171, %174 : vector<1x128xf32>
    %176 = math.rsqrt %175 : vector<1x128xf32>
    %177 = arith.mulf %172, %176 : vector<1x128xf32>
    %178 = arith.mulf %162, %177 : vector<1x128xf32>
    %179 = arith.subf %173, %178 : vector<1x128xf32>
    %180 = vector.broadcast %177 : vector<1x128xf32> to vector<8x128xf32>
    %181 = arith.mulf %158, %180 : vector<8x128xf32>
    %182 = vector.broadcast %179 : vector<1x128xf32> to vector<8x128xf32>
    %183 = arith.addf %181, %182 : vector<8x128xf32>
    %cst_77 = arith.constant 0.000000e+00 : f32
    %184 = vector.broadcast %cst_77 : f32 to vector<8x128xf32>
    %185 = arith.maximumf %183, %184 : vector<8x128xf32>
    %c5_78 = arith.constant 5 : index
    %c0_79 = arith.constant 0 : index
    %c0_80 = arith.constant 0 : index
    %186 = vector.load %arg2[%c5_78, %c0_79, %c0_80] : memref<10x128x128xbf16, #tpu.memory_space<vmem>>, vector<1x128x128xbf16>
    %187 = vector.shape_cast %186 : vector<1x128x128xbf16> to vector<128x128xbf16>
    %188 = arith.truncf %185 : vector<8x128xf32> to vector<8x128xbf16>
    %cst_81 = arith.constant dense<0.000000e+00> : vector<8x128xf32>
    %189 = tpu.matmul %188, %187, %cst_81 {dimension_numbers = #tpu.dot_dimension_numbers<[1], [0], [0], [1], [0, 0, 1, 1], [], []>} : vector<8x128xbf16>, vector<128x128xbf16>, vector<8x128xf32> -> vector<8x128xf32>
    %cst_82 = arith.constant dense<0.000000e+00> : vector<128xf32>
    %190 = vector.multi_reduction <add>, %189, %cst_82 [0] : vector<8x128xf32> to vector<128xf32>
    %191 = vector.shape_cast %190 : vector<128xf32> to vector<1x128xf32>
    %cst_83 = arith.constant 8.000000e+00 : f32
    %192 = vector.broadcast %cst_83 : f32 to vector<1x128xf32>
    %193 = arith.divf %191, %192 : vector<1x128xf32>
    %194 = arith.mulf %189, %189 : vector<8x128xf32>
    %cst_84 = arith.constant dense<0.000000e+00> : vector<128xf32>
    %195 = vector.multi_reduction <add>, %194, %cst_84 [0] : vector<8x128xf32> to vector<128xf32>
    %196 = vector.shape_cast %195 : vector<128xf32> to vector<1x128xf32>
    %cst_85 = arith.constant 8.000000e+00 : f32
    %197 = vector.broadcast %cst_85 : f32 to vector<1x128xf32>
    %198 = arith.divf %196, %197 : vector<1x128xf32>
    %199 = arith.mulf %193, %193 : vector<1x128xf32>
    %200 = arith.subf %198, %199 : vector<1x128xf32>
    %cst_86 = arith.constant 0.000000e+00 : f32
    %201 = vector.broadcast %cst_86 : f32 to vector<1x128xf32>
    %202 = arith.maximumf %200, %201 : vector<1x128xf32>
    %c6 = arith.constant 6 : index
    %c0_87 = arith.constant 0 : index
    %203 = vector.load %arg3[%c6, %c0_87] : memref<24x128xf32, #tpu.memory_space<vmem>>, vector<1x128xf32>
    %c16 = arith.constant 16 : index
    %c0_88 = arith.constant 0 : index
    %204 = vector.load %arg3[%c16, %c0_88] : memref<24x128xf32, #tpu.memory_space<vmem>>, vector<1x128xf32>
    %cst_89 = arith.constant 9.99999974E-6 : f32
    %205 = vector.broadcast %cst_89 : f32 to vector<1x128xf32>
    %206 = arith.addf %202, %205 : vector<1x128xf32>
    %207 = math.rsqrt %206 : vector<1x128xf32>
    %208 = arith.mulf %203, %207 : vector<1x128xf32>
    %209 = arith.mulf %193, %208 : vector<1x128xf32>
    %210 = arith.subf %204, %209 : vector<1x128xf32>
    %211 = vector.broadcast %208 : vector<1x128xf32> to vector<8x128xf32>
    %212 = arith.mulf %189, %211 : vector<8x128xf32>
    %213 = vector.broadcast %210 : vector<1x128xf32> to vector<8x128xf32>
    %214 = arith.addf %212, %213 : vector<8x128xf32>
    %cst_90 = arith.constant 0.000000e+00 : f32
    %215 = vector.broadcast %cst_90 : f32 to vector<8x128xf32>
    %216 = arith.maximumf %214, %215 : vector<8x128xf32>
    %c6_91 = arith.constant 6 : index
    %c0_92 = arith.constant 0 : index
    %c0_93 = arith.constant 0 : index
    %217 = vector.load %arg2[%c6_91, %c0_92, %c0_93] : memref<10x128x128xbf16, #tpu.memory_space<vmem>>, vector<1x128x128xbf16>
    %218 = vector.shape_cast %217 : vector<1x128x128xbf16> to vector<128x128xbf16>
    %219 = arith.truncf %216 : vector<8x128xf32> to vector<8x128xbf16>
    %cst_94 = arith.constant dense<0.000000e+00> : vector<8x128xf32>
    %220 = tpu.matmul %219, %218, %cst_94 {dimension_numbers = #tpu.dot_dimension_numbers<[1], [0], [0], [1], [0, 0, 1, 1], [], []>} : vector<8x128xbf16>, vector<128x128xbf16>, vector<8x128xf32> -> vector<8x128xf32>
    %cst_95 = arith.constant dense<0.000000e+00> : vector<128xf32>
    %221 = vector.multi_reduction <add>, %220, %cst_95 [0] : vector<8x128xf32> to vector<128xf32>
    %222 = vector.shape_cast %221 : vector<128xf32> to vector<1x128xf32>
    %cst_96 = arith.constant 8.000000e+00 : f32
    %223 = vector.broadcast %cst_96 : f32 to vector<1x128xf32>
    %224 = arith.divf %222, %223 : vector<1x128xf32>
    %225 = arith.mulf %220, %220 : vector<8x128xf32>
    %cst_97 = arith.constant dense<0.000000e+00> : vector<128xf32>
    %226 = vector.multi_reduction <add>, %225, %cst_97 [0] : vector<8x128xf32> to vector<128xf32>
    %227 = vector.shape_cast %226 : vector<128xf32> to vector<1x128xf32>
    %cst_98 = arith.constant 8.000000e+00 : f32
    %228 = vector.broadcast %cst_98 : f32 to vector<1x128xf32>
    %229 = arith.divf %227, %228 : vector<1x128xf32>
    %230 = arith.mulf %224, %224 : vector<1x128xf32>
    %231 = arith.subf %229, %230 : vector<1x128xf32>
    %cst_99 = arith.constant 0.000000e+00 : f32
    %232 = vector.broadcast %cst_99 : f32 to vector<1x128xf32>
    %233 = arith.maximumf %231, %232 : vector<1x128xf32>
    %c7 = arith.constant 7 : index
    %c0_100 = arith.constant 0 : index
    %234 = vector.load %arg3[%c7, %c0_100] : memref<24x128xf32, #tpu.memory_space<vmem>>, vector<1x128xf32>
    %c17 = arith.constant 17 : index
    %c0_101 = arith.constant 0 : index
    %235 = vector.load %arg3[%c17, %c0_101] : memref<24x128xf32, #tpu.memory_space<vmem>>, vector<1x128xf32>
    %cst_102 = arith.constant 9.99999974E-6 : f32
    %236 = vector.broadcast %cst_102 : f32 to vector<1x128xf32>
    %237 = arith.addf %233, %236 : vector<1x128xf32>
    %238 = math.rsqrt %237 : vector<1x128xf32>
    %239 = arith.mulf %234, %238 : vector<1x128xf32>
    %240 = arith.mulf %224, %239 : vector<1x128xf32>
    %241 = arith.subf %235, %240 : vector<1x128xf32>
    %242 = vector.broadcast %239 : vector<1x128xf32> to vector<8x128xf32>
    %243 = arith.mulf %220, %242 : vector<8x128xf32>
    %244 = vector.broadcast %241 : vector<1x128xf32> to vector<8x128xf32>
    %245 = arith.addf %243, %244 : vector<8x128xf32>
    %cst_103 = arith.constant 0.000000e+00 : f32
    %246 = vector.broadcast %cst_103 : f32 to vector<8x128xf32>
    %247 = arith.maximumf %245, %246 : vector<8x128xf32>
    %c7_104 = arith.constant 7 : index
    %c0_105 = arith.constant 0 : index
    %c0_106 = arith.constant 0 : index
    %248 = vector.load %arg2[%c7_104, %c0_105, %c0_106] : memref<10x128x128xbf16, #tpu.memory_space<vmem>>, vector<1x128x128xbf16>
    %249 = vector.shape_cast %248 : vector<1x128x128xbf16> to vector<128x128xbf16>
    %250 = arith.truncf %247 : vector<8x128xf32> to vector<8x128xbf16>
    %cst_107 = arith.constant dense<0.000000e+00> : vector<8x128xf32>
    %251 = tpu.matmul %250, %249, %cst_107 {dimension_numbers = #tpu.dot_dimension_numbers<[1], [0], [0], [1], [0, 0, 1, 1], [], []>} : vector<8x128xbf16>, vector<128x128xbf16>, vector<8x128xf32> -> vector<8x128xf32>
    %cst_108 = arith.constant dense<0.000000e+00> : vector<128xf32>
    %252 = vector.multi_reduction <add>, %251, %cst_108 [0] : vector<8x128xf32> to vector<128xf32>
    %253 = vector.shape_cast %252 : vector<128xf32> to vector<1x128xf32>
    %cst_109 = arith.constant 8.000000e+00 : f32
    %254 = vector.broadcast %cst_109 : f32 to vector<1x128xf32>
    %255 = arith.divf %253, %254 : vector<1x128xf32>
    %256 = arith.mulf %251, %251 : vector<8x128xf32>
    %cst_110 = arith.constant dense<0.000000e+00> : vector<128xf32>
    %257 = vector.multi_reduction <add>, %256, %cst_110 [0] : vector<8x128xf32> to vector<128xf32>
    %258 = vector.shape_cast %257 : vector<128xf32> to vector<1x128xf32>
    %cst_111 = arith.constant 8.000000e+00 : f32
    %259 = vector.broadcast %cst_111 : f32 to vector<1x128xf32>
    %260 = arith.divf %258, %259 : vector<1x128xf32>
    %261 = arith.mulf %255, %255 : vector<1x128xf32>
    %262 = arith.subf %260, %261 : vector<1x128xf32>
    %cst_112 = arith.constant 0.000000e+00 : f32
    %263 = vector.broadcast %cst_112 : f32 to vector<1x128xf32>
    %264 = arith.maximumf %262, %263 : vector<1x128xf32>
    %c8 = arith.constant 8 : index
    %c0_113 = arith.constant 0 : index
    %265 = vector.load %arg3[%c8, %c0_113] : memref<24x128xf32, #tpu.memory_space<vmem>>, vector<1x128xf32>
    %c18 = arith.constant 18 : index
    %c0_114 = arith.constant 0 : index
    %266 = vector.load %arg3[%c18, %c0_114] : memref<24x128xf32, #tpu.memory_space<vmem>>, vector<1x128xf32>
    %cst_115 = arith.constant 9.99999974E-6 : f32
    %267 = vector.broadcast %cst_115 : f32 to vector<1x128xf32>
    %268 = arith.addf %264, %267 : vector<1x128xf32>
    %269 = math.rsqrt %268 : vector<1x128xf32>
    %270 = arith.mulf %265, %269 : vector<1x128xf32>
    %271 = arith.mulf %255, %270 : vector<1x128xf32>
    %272 = arith.subf %266, %271 : vector<1x128xf32>
    %273 = vector.broadcast %270 : vector<1x128xf32> to vector<8x128xf32>
    %274 = arith.mulf %251, %273 : vector<8x128xf32>
    %275 = vector.broadcast %272 : vector<1x128xf32> to vector<8x128xf32>
    %276 = arith.addf %274, %275 : vector<8x128xf32>
    %cst_116 = arith.constant 0.000000e+00 : f32
    %277 = vector.broadcast %cst_116 : f32 to vector<8x128xf32>
    %278 = arith.maximumf %276, %277 : vector<8x128xf32>
    %c8_117 = arith.constant 8 : index
    %c0_118 = arith.constant 0 : index
    %c0_119 = arith.constant 0 : index
    %279 = vector.load %arg2[%c8_117, %c0_118, %c0_119] : memref<10x128x128xbf16, #tpu.memory_space<vmem>>, vector<1x128x128xbf16>
    %280 = vector.shape_cast %279 : vector<1x128x128xbf16> to vector<128x128xbf16>
    %281 = arith.truncf %278 : vector<8x128xf32> to vector<8x128xbf16>
    %cst_120 = arith.constant dense<0.000000e+00> : vector<8x128xf32>
    %282 = tpu.matmul %281, %280, %cst_120 {dimension_numbers = #tpu.dot_dimension_numbers<[1], [0], [0], [1], [0, 0, 1, 1], [], []>} : vector<8x128xbf16>, vector<128x128xbf16>, vector<8x128xf32> -> vector<8x128xf32>
    %cst_121 = arith.constant dense<0.000000e+00> : vector<128xf32>
    %283 = vector.multi_reduction <add>, %282, %cst_121 [0] : vector<8x128xf32> to vector<128xf32>
    %284 = vector.shape_cast %283 : vector<128xf32> to vector<1x128xf32>
    %cst_122 = arith.constant 8.000000e+00 : f32
    %285 = vector.broadcast %cst_122 : f32 to vector<1x128xf32>
    %286 = arith.divf %284, %285 : vector<1x128xf32>
    %287 = arith.mulf %282, %282 : vector<8x128xf32>
    %cst_123 = arith.constant dense<0.000000e+00> : vector<128xf32>
    %288 = vector.multi_reduction <add>, %287, %cst_123 [0] : vector<8x128xf32> to vector<128xf32>
    %289 = vector.shape_cast %288 : vector<128xf32> to vector<1x128xf32>
    %cst_124 = arith.constant 8.000000e+00 : f32
    %290 = vector.broadcast %cst_124 : f32 to vector<1x128xf32>
    %291 = arith.divf %289, %290 : vector<1x128xf32>
    %292 = arith.mulf %286, %286 : vector<1x128xf32>
    %293 = arith.subf %291, %292 : vector<1x128xf32>
    %cst_125 = arith.constant 0.000000e+00 : f32
    %294 = vector.broadcast %cst_125 : f32 to vector<1x128xf32>
    %295 = arith.maximumf %293, %294 : vector<1x128xf32>
    %c9 = arith.constant 9 : index
    %c0_126 = arith.constant 0 : index
    %296 = vector.load %arg3[%c9, %c0_126] : memref<24x128xf32, #tpu.memory_space<vmem>>, vector<1x128xf32>
    %c19 = arith.constant 19 : index
    %c0_127 = arith.constant 0 : index
    %297 = vector.load %arg3[%c19, %c0_127] : memref<24x128xf32, #tpu.memory_space<vmem>>, vector<1x128xf32>
    %cst_128 = arith.constant 9.99999974E-6 : f32
    %298 = vector.broadcast %cst_128 : f32 to vector<1x128xf32>
    %299 = arith.addf %295, %298 : vector<1x128xf32>
    %300 = math.rsqrt %299 : vector<1x128xf32>
    %301 = arith.mulf %296, %300 : vector<1x128xf32>
    %302 = arith.mulf %286, %301 : vector<1x128xf32>
    %303 = arith.subf %297, %302 : vector<1x128xf32>
    %304 = vector.broadcast %301 : vector<1x128xf32> to vector<8x128xf32>
    %305 = arith.mulf %282, %304 : vector<8x128xf32>
    %306 = vector.broadcast %303 : vector<1x128xf32> to vector<8x128xf32>
    %307 = arith.addf %305, %306 : vector<8x128xf32>
    %cst_129 = arith.constant 0.000000e+00 : f32
    %308 = vector.broadcast %cst_129 : f32 to vector<8x128xf32>
    %309 = arith.maximumf %307, %308 : vector<8x128xf32>
    %c9_130 = arith.constant 9 : index
    %c0_131 = arith.constant 0 : index
    %c0_132 = arith.constant 0 : index
    %310 = vector.load %arg2[%c9_130, %c0_131, %c0_132] : memref<10x128x128xbf16, #tpu.memory_space<vmem>>, vector<1x128x128xbf16>
    %311 = vector.shape_cast %310 : vector<1x128x128xbf16> to vector<128x128xbf16>
    %312 = arith.truncf %309 : vector<8x128xf32> to vector<8x128xbf16>
    %cst_133 = arith.constant dense<0.000000e+00> : vector<8x128xf32>
    %313 = tpu.matmul %312, %311, %cst_133 {dimension_numbers = #tpu.dot_dimension_numbers<[1], [0], [0], [1], [0, 0, 1, 1], [], []>} : vector<8x128xbf16>, vector<128x128xbf16>, vector<8x128xf32> -> vector<8x128xf32>
    %c20 = arith.constant 20 : index
    %c0_134 = arith.constant 0 : index
    %314 = vector.load %arg3[%c20, %c0_134] : memref<24x128xf32, #tpu.memory_space<vmem>>, vector<1x128xf32>
    %315 = vector.broadcast %314 : vector<1x128xf32> to vector<8x128xf32>
    %316 = arith.addf %313, %315 : vector<8x128xf32>
    %c0_135 = arith.constant 0 : index
    %c0_136 = arith.constant 0 : index
    %317 = vector.load %arg4[%c0_135, %c0_136] : memref<8x128xf32, #tpu.memory_space<vmem>>, vector<8x128xf32>
    tpu.vector_store %arg4[%c0_135, %c0_136], %316 {strides = array<i32>} : memref<8x128xf32, #tpu.memory_space<vmem>>, vector<8x128xf32>,
    return
  }
}

</mosaic_0001>

<llo_original>
// kernel: baseline_classifier_forward.1
$region0: #{baseline_classifier_forward.1}
  #allocation0 [shape = 'u32[]', space=smem, size = 0x4, offset = 0x4, fixed_abs, tag = 'smem constant byte address 0x4 - core index']
  #allocation1 [shape = 'u32[144,128]{1,0:T(1,128)}', space=vmem, size = 0x12000, scoped, tag = 'internal scratch']
  %s0 = inlined_call_operand.hbm [shape: f32[8,32], index: 0, kind: input, shape index: {}]
  %s1 = inlined_call_operand.hbm [shape: bf16[32,128], index: 1, kind: input, shape index: {}]
  %s2 = inlined_call_operand.hbm [shape: bf16[10,128,128], index: 2, kind: input, shape index: {}]
  %s3 = inlined_call_operand.hbm [shape: f32[24,128], index: 3, kind: input, shape index: {}]
  %s4 = inlined_call_operand.vmem [shape: f32[8,128], index: 4, kind: output, shape index: {}]
  %s5 = sld [smem:[#allocation0]]
  $region42: #{baseline_classifier_forward.1} parent=0
    _
  %s7 = ssub.s32 1, %s5
  %s8 = scalar_select 0, %s7, %s5
  $region1: #{baseline_classifier_forward.1} parent=0
    #allocation2 [shape = 'u8[4096]{0}', space=vmem, size = 0x1000, scoped, tag = 'input window, operand 0, single buffered']
    #allocation3 [shape = 's32[1]{0}', space=sflag, size = 0x4, scoped, tag = 'scoped memory for baseline_classifier_forward.1']
    #allocation4 [shape = 'u8[8192]{0}', space=vmem, size = 0x2000, scoped, tag = 'input window, operand 1, single buffered']
    #allocation5 [shape = 's32[1]{0}', space=sflag, size = 0x4, scoped, tag = 'scoped memory for baseline_classifier_forward.1']
    #allocation6 [shape = 'u8[327680]{0}', space=vmem, size = 0x50000, scoped, tag = 'input window, operand 2, single buffered']
    #allocation7 [shape = 'u8[12288]{0}', space=vmem, size = 0x3000, scoped, tag = 'input window, operand 3, single buffered']
    #allocation8 [shape = 's32[1]{0}', space=sflag, size = 0x4, scoped, tag = 'scoped memory for baseline_classifier_forward.1']
    %9 = vsyncpa [#allocation3], 0
    %10 = vsyncpa [#allocation5], 0
    %11 = vsyncpa [#allocation8], 0
    // Predicated region
    $region2: #{baseline_classifier_forward.1} parent=1 // pred_check
      _
    $region3: #{baseline_classifier_forward.1} parent=1 // pred_check_branch
      %13 = sbr.rel (0) target = $region5
    $region4: #{baseline_classifier_forward.1} parent=1 // pred_region
      %s15 = ssub.s32 128, 128
      %16 = vsyncadd [#allocation3], %s15
      %s18 = sshll.u32 [#allocation2], 4
      %s19 = int_to_ptr.vmem [resolvable:$true] %s18
      %21 = dma.hbm_to_vmem [thread:$0]  %s0, 128, %s19, [#allocation3]
    $region5: #{baseline_classifier_forward.1} parent=1 // pred_fallthru
      _
    // Predicated region
    $region6: #{baseline_classifier_forward.1} parent=1 // pred_check
      _
    $region7: #{baseline_classifier_forward.1} parent=1 // pred_check_branch
      %23 = sbr.rel (0) target = $region9
    $region8: #{baseline_classifier_forward.1} parent=1 // pred_region
      %s25 = ssub.s32 256, 256
      %26 = vsyncadd [#allocation5], %s25
      %s27 = sshll.u32 [#allocation4], 4
      %s28 = int_to_ptr.vmem [resolvable:$true] %s27
      %33 = dma.hbm_to_vmem [thread:$0]  %s1, 256, %s28, [#allocation5], 64, 64, 4
    $region9: #{baseline_classifier_forward.1} parent=1 // pred_fallthru
      _
    // Predicated region
    $region10: #{baseline_classifier_forward.1} parent=1 // pred_check
      _
    $region11: #{baseline_classifier_forward.1} parent=1 // pred_check_branch
      %35 = sbr.rel (0) target = $region13
    $region12: #{baseline_classifier_forward.1} parent=1 // pred_region
      %s37 = ssub.s32 10240, 10240
      %38 = vsyncadd [#allocation5], %s37
      %s39 = sshll.u32 [#allocation6], 4
      %s40 = int_to_ptr.vmem [resolvable:$true] %s39
      %45 = dma.hbm_to_vmem [thread:$0]  %s2, 10240, %s40, [#allocation5], 64, 64, 4
    $region13: #{baseline_classifier_forward.1} parent=1 // pred_fallthru
      _
    // Predicated region
    $region14: #{baseline_classifier_forward.1} parent=1 // pred_check
      _
    $region15: #{baseline_classifier_forward.1} parent=1 // pred_check_branch
      %47 = sbr.rel (0) target = $region17
    $region16: #{baseline_classifier_forward.1} parent=1 // pred_region
      %s49 = ssub.s32 384, 384
      %50 = vsyncadd [#allocation8], %s49
      %s51 = sshll.u32 [#allocation7], 4
      %s52 = int_to_ptr.vmem [resolvable:$true] %s51
      %57 = dma.hbm_to_vmem [thread:$0]  %s3, 384, %s52, [#allocation8], 128, 128, 8
    $region17: #{baseline_classifier_forward.1} parent=1 // pred_fallthru
      _
    // Predicated region
    $region18: #{baseline_classifier_forward.1} parent=1 // pred_check
      _
    $region19: #{baseline_classifier_forward.1} parent=1 // pred_check_branch
      %59 = sbr.rel (0) target = $region21
    $region20: #{baseline_classifier_forward.1} parent=1 // pred_region
      %60 = dma.done [#allocation3], 128
    $region21: #{baseline_classifier_forward.1} parent=1 // pred_fallthru
      _
    // Predicated region
    $region22: #{baseline_classifier_forward.1} parent=1 // pred_check
      _
    $region23: #{baseline_classifier_forward.1} parent=1 // pred_check_branch
      %62 = sbr.rel (0) target = $region25
    $region24: #{baseline_classifier_forward.1} parent=1 // pred_region
      %63 = dma.done [#allocation5], 256
    $region25: #{baseline_classifier_forward.1} parent=1 // pred_fallthru
      _
    // Predicated region
    $region26: #{baseline_classifier_forward.1} parent=1 // pred_check
      _
    $region27: #{baseline_classifier_forward.1} parent=1 // pred_check_branch
      %65 = sbr.rel (0) target = $region29
    $region28: #{baseline_classifier_forward.1} parent=1 // pred_region
      %66 = dma.done [#allocation5], 10240
    $region29: #{baseline_classifier_forward.1} parent=1 // pred_fallthru
      _
    // Predicated region
    $region30: #{baseline_classifier_forward.1} parent=1 // pred_check
      _
    $region31: #{baseline_classifier_forward.1} parent=1 // pred_check_branch
      %68 = sbr.rel (0) target = $region33
    $region32: #{baseline_classifier_forward.1} parent=1 // pred_region
      %69 = dma.done [#allocation8], 384
    $region33: #{baseline_classifier_forward.1} parent=1 // pred_fallthru
      _
    %v71 = vld [vmem:[#allocation2] sm:$0xff]
    %v72 = vld [vmem:[#allocation4] sm:$0xf]
    %v73 = vld [vmem:[#allocation4 + $0x4] sm:$0xf]
    %v74 = vld [vmem:[#allocation4 + $0x8] sm:$0xf]
    %v75 = vld [vmem:[#allocation4 + $0xc] sm:$0xf]
    %v76 = vpack.c.bf16 %v71, %v71
    %v81 = vunpack.c.l.b16 %v72
    %v82 = vunpack.c.l.b16 %v73
    %v83 = vunpack.c.l.b16 %v74
    %v84 = vunpack.c.l.b16 %v75
    %v85 = vpack.c.b16 %v82, %v81
    %v86 = vpack.c.b16 %v84, %v83
    %vm89 = vcmask 261120
    %v91 = vsel %vm89, %v76, 0
    %93 = vmatprep.subr.bf16.mxu0 0
    %94 = vmatpush1.bf16.msra.mxu0 0
    %95 = vmatprep.subr.bf16.mxu0 0
    %96 = vmatpush1.bf16.msra.mxu0 0
    %97 = vmatprep.subr.bf16.mxu0 0
    %98 = vmatpush1.bf16.msra.mxu0 0
    %99 = vmatprep.subr.bf16.mxu0 0
    %100 = vmatpush1.bf16.msra.mxu0 0
    %101 = vmatprep.subr.bf16.mxu0 0
    %102 = vmatpush1.bf16.msra.mxu0 0
    %103 = vmatprep.subr.bf16.mxu0 0
    %104 = vmatpush1.bf16.msra.mxu0 0
    %105 = vmatprep.subr.bf16.mxu0 0
    %106 = vmatpush1.bf16.msra.mxu0 %v86
    %107 = vmatprep.subr.bf16.mxu0 0
    %108 = vmatpush1.bf16.msra.mxu0 %v85
    %109 = vmatprep.subr.bf16.mxu0 0
    %110 = vmatpush2.bf16.msra.mxu0 0
    %111 = vmatprep.subr.bf16.mxu0 0
    %112 = vmatpush2.bf16.msra.mxu0 0
    %113 = vmatprep.subr.bf16.mxu0 0
    %114 = vmatpush2.bf16.msra.mxu0 0
    %115 = vmatprep.subr.bf16.mxu0 0
    %116 = vmatpush2.bf16.msra.mxu0 0
    %117 = vmatprep.subr.bf16.mxu0 0
    %118 = vmatpush2.bf16.msra.mxu0 0
    %119 = vmatprep.subr.bf16.mxu0 0
    %120 = vmatpush2.bf16.msra.mxu0 0
    %121 = vmatprep.subr.bf16.mxu0 0
    %122 = vmatpush2.bf16.msra.mxu0 0
    %123 = vmatprep.subr.bf16.mxu0 0
    %124 = vmatpush2.bf16.msra.mxu0 0
    %125 = vmatprep.mubr.bf16.mxu0 0
    %126 = vmatmul.mubr.bf16.gmra.mxu0 %v91
    %v127 = vpop.f32.mrf.mxu0
    %v128 = vadd.f32 0.0, %v127
    %v129 = vpop.f32.mrf.mxu0
    %v130 = vpop.f32.mrf.mxu0
    %v131 = vpop.f32.mrf.mxu0
    %132 = vdwg.mxu0
    %v133 = vrot.slane %v128, 4
    %v134 = vadd.f32 %v128, %v133
    %v135 = vrot.slane %v134, 2
    %v136 = vadd.f32 %v134, %v135
    %v137 = vrot.slane %v136, 1
    %v138 = vadd.f32 %v136, %v137
    %v139 = vrcp.pop 8.0
    %v140 = vmul.f32 %v138, %v139
    %v141 = vmul.f32 %v128, %v128
    %v142 = vrot.slane %v141, 4
    %v143 = vadd.f32 %v141, %v142
    %v144 = vrot.slane %v143, 2
    %v145 = vadd.f32 %v143, %v144
    %v146 = vrot.slane %v145, 1
    %v147 = vadd.f32 %v145, %v146
    %v148 = vmul.f32 %v147, %v139
    %v149 = vmul.f32 %v140, %v140
    %v150 = vsub.f32 %v148, %v149
    %v151 = vmax.f32 %v150, 0.0
    %v152 = vld [vmem:[#allocation7] sm:$0x1]
    %v153 = vld [vmem:[#allocation7 + $0xa] sm:$0x1]
    %v154 = vadd.f32 %v151, 1e-05
    %v155 = vrsqrt.pop %v154
    %v156 = vmul.f32 %v152, %v155
    %v157 = vmul.f32 %v140, %v156
    %v158 = vsub.f32 %v153, %v157
    %v159 = vlaneseq
    %v160 = vshrl.u32 %v159, 7
    %v161 = vsub.s32 0, %v160
    %v162 = vrot.slane %v156, %v161
    %v163 = vmul.f32 %v128, %v162
    %v164 = vlaneseq
    %v165 = vshrl.u32 %v164, 7
    %v166 = vsub.s32 0, %v165
    %v167 = vrot.slane %v158, %v166
    %v168 = vadd.f32 %v163, %v167
    %v169 = vmax.f32 %v168, 0.0
    %v170 = vld [vmem:[#allocation6] sm:$0xf]
    %v171 = vld [vmem:[#allocation6 + $0x4] sm:$0xf]
    %v172 = vld [vmem:[#allocation6 + $0x8] sm:$0xf]
    %v173 = vld [vmem:[#allocation6 + $0xc] sm:$0xf]
    %v174 = vld [vmem:[#allocation6 + $0x10] sm:$0xf]
    %v175 = vld [vmem:[#allocation6 + $0x14] sm:$0xf]
    %v176 = vld [vmem:[#allocation6 + $0x18] sm:$0xf]
    %v177 = vld [vmem:[#allocation6 + $0x1c] sm:$0xf]
    %v178 = vld [vmem:[#allocation6 + $0x20] sm:$0xf]
    %v179 = vld [vmem:[#allocation6 + $0x24] sm:$0xf]
    %v180 = vld [vmem:[#allocation6 + $0x28] sm:$0xf]
    %v181 = vld [vmem:[#allocation6 + $0x2c] sm:$0xf]
    %v182 = vld [vmem:[#allocation6 + $0x30] sm:$0xf]
    %v183 = vld [vmem:[#allocation6 + $0x34] sm:$0xf]
    %v184 = vld [vmem:[#allocation6 + $0x38] sm:$0xf]
    %v185 = vld [vmem:[#allocation6 + $0x3c] sm:$0xf]
    %v186 = vpack.c.bf16 %v169, %v169
    %v203 = vunpack.c.l.b16 %v170
    %v204 = vunpack.c.l.b16 %v171
    %v205 = vunpack.c.l.b16 %v172
    %v206 = vunpack.c.l.b16 %v173
    %v207 = vunpack.c.l.b16 %v174
    %v208 = vunpack.c.l.b16 %v175
    %v209 = vunpack.c.l.b16 %v176
    %v210 = vunpack.c.l.b16 %v177
    %v211 = vunpack.c.l.b16 %v178
    %v212 = vunpack.c.l.b16 %v179
    %v213 = vunpack.c.l.b16 %v180
    %v214 = vunpack.c.l.b16 %v181
    %v215 = vunpack.c.l.b16 %v182
    %v216 = vunpack.c.l.b16 %v183
    %v217 = vunpack.c.l.b16 %v184
    %v218 = vunpack.c.l.b16 %v185
    %v219 = vpack.c.b16 %v204, %v203
    %v220 = vpack.c.b16 %v206, %v205
    %v221 = vpack.c.b16 %v208, %v207
    %v222 = vpack.c.b16 %v210, %v209
    %v223 = vpack.c.b16 %v212, %v211
    %v224 = vpack.c.b16 %v214, %v213
    %v225 = vpack.c.b16 %v216, %v215
    %v226 = vpack.c.b16 %v218, %v217
    %235 = vmatprep.subr.bf16.mxu0 0
    %236 = vmatpush1.bf16.msra.mxu0 %v226
    %237 = vmatprep.subr.bf16.mxu0 0
    %238 = vmatpush1.bf16.msra.mxu0 %v225
    %239 = vmatprep.subr.bf16.mxu0 0
    %240 = vmatpush1.bf16.msra.mxu0 %v224
    %241 = vmatprep.subr.bf16.mxu0 0
    %242 = vmatpush1.bf16.msra.mxu0 %v223
    %243 = vmatprep.subr.bf16.mxu0 0
    %244 = vmatpush1.bf16.msra.mxu0 %v222
    %245 = vmatprep.subr.bf16.mxu0 0
    %246 = vmatpush1.bf16.msra.mxu0 %v221
    %247 = vmatprep.subr.bf16.mxu0 0
    %248 = vmatpush1.bf16.msra.mxu0 %v220
    %249 = vmatprep.subr.bf16.mxu0 0
    %250 = vmatpush1.bf16.msra.mxu0 %v219
    %251 = vmatprep.subr.bf16.mxu0 0
    %252 = vmatpush2.bf16.msra.mxu0 0
    %253 = vmatprep.subr.bf16.mxu0 0
    %254 = vmatpush2.bf16.msra.mxu0 0
    %255 = vmatprep.subr.bf16.mxu0 0
    %256 = vmatpush2.bf16.msra.mxu0 0
    %257 = vmatprep.subr.bf16.mxu0 0
    %258 = vmatpush2.bf16.msra.mxu0 0
    %259 = vmatprep.subr.bf16.mxu0 0
    %260 = vmatpush2.bf16.msra.mxu0 0
    %261 = vmatprep.subr.bf16.mxu0 0
    %262 = vmatpush2.bf16.msra.mxu0 0
    %263 = vmatprep.subr.bf16.mxu0 0
    %264 = vmatpush2.bf16.msra.mxu0 0
    %265 = vmatprep.subr.bf16.mxu0 0
    %266 = vmatpush2.bf16.msra.mxu0 0
    %267 = vmatprep.mubr.bf16.mxu0 0
    %268 = vmatmul.mubr.bf16.gmra.mxu0 %v186
    %v269 = vpop.f32.mrf.mxu0
    %v270 = vadd.f32 0.0, %v269
    %v271 = vpop.f32.mrf.mxu0
    %v272 = vpop.f32.mrf.mxu0
    %v273 = vpop.f32.mrf.mxu0
    %274 = vdwg.mxu0
    %v275 = vrot.slane %v270, 4
    %v276 = vadd.f32 %v270, %v275
    %v277 = vrot.slane %v276, 2
    %v278 = vadd.f32 %v276, %v277
    %v279 = vrot.slane %v278, 1
    %v280 = vadd.f32 %v278, %v279
    %v281 = vmul.f32 %v280, %v139
    %v282 = vmul.f32 %v270, %v270
    %v283 = vrot.slane %v282, 4
    %v284 = vadd.f32 %v282, %v283
    %v285 = vrot.slane %v284, 2
    %v286 = vadd.f32 %v284, %v285
    %v287 = vrot.slane %v286, 1
    %v288 = vadd.f32 %v286, %v287
    %v289 = vmul.f32 %v288, %v139
    %v290 = vmul.f32 %v281, %v281
    %v291 = vsub.f32 %v289, %v290
    %v292 = vmax.f32 %v291, 0.0
    %v293 = vld [vmem:[#allocation7 + $0x1] sm:$0x1]
    %v294 = vld [vmem:[#allocation7 + $0xb] sm:$0x1]
    %v295 = vadd.f32 %v292, 1e-05
    %v296 = vrsqrt.pop %v295
    %v297 = vmul.f32 %v293, %v296
    %v298 = vmul.f32 %v281, %v297
    %v299 = vsub.f32 %v294, %v298
    %v300 = vlaneseq
    %v301 = vshrl.u32 %v300, 7
    %v302 = vsub.s32 0, %v301
    %v303 = vrot.slane %v297, %v302
    %v304 = vmul.f32 %v270, %v303
    %v305 = vlaneseq
    %v306 = vshrl.u32 %v305, 7
    %v307 = vsub.s32 0, %v306
    %v308 = vrot.slane %v299, %v307
    %v309 = vadd.f32 %v304, %v308
    %v310 = vmax.f32 %v309, 0.0
    %s311 = scalar_lea.vmem [#allocation6], 64
    %v312 = vld [vmem:[%s311] sm:$0xf]
    %v313 = vld [vmem:[%s311 + $0x4] sm:$0xf]
    %v314 = vld [vmem:[%s311 + $0x8] sm:$0xf]
    %v315 = vld [vmem:[%s311 + $0xc] sm:$0xf]
    %v316 = vld [vmem:[%s311 + $0x10] sm:$0xf]
    %v317 = vld [vmem:[%s311 + $0x14] sm:$0xf]
    %v318 = vld [vmem:[%s311 + $0x18] sm:$0xf]
    %v319 = vld [vmem:[%s311 + $0x1c] sm:$0xf]
    %v320 = vld [vmem:[%s311 + $0x20] sm:$0xf]
    %v321 = vld [vmem:[%s311 + $0x24] sm:$0xf]
    %v322 = vld [vmem:[%s311 + $0x28] sm:$0xf]
    %v323 = vld [vmem:[%s311 + $0x2c] sm:$0xf]
    %v324 = vld [vmem:[%s311 + $0x30] sm:$0xf]
    %v325 = vld [vmem:[%s311 + $0x34] sm:$0xf]
    %v326 = vld [vmem:[%s311 + $0x38] sm:$0xf]
    %v327 = vld [vmem:[%s311 + $0x3c] sm:$0xf]
    %v328 = vpack.c.bf16 %v310, %v310
    %v345 = vunpack.c.l.b16 %v312
    %v346 = vunpack.c.l.b16 %v313
    %v347 = vunpack.c.l.b16 %v314
    %v348 = vunpack.c.l.b16 %v315
    %v349 = vunpack.c.l.b16 %v316
    %v350 = vunpack.c.l.b16 %v317
    %v351 = vunpack.c.l.b16 %v318
    %v352 = vunpack.c.l.b16 %v319
    %v353 = vunpack.c.l.b16 %v320
    %v354 = vunpack.c.l.b16 %v321
    %v355 = vunpack.c.l.b16 %v322
    %v356 = vunpack.c.l.b16 %v323
    %v357 = vunpack.c.l.b16 %v324
    %v358 = vunpack.c.l.b16 %v325
    %v359 = vunpack.c.l.b16 %v326
    %v360 = vunpack.c.l.b16 %v327
    %v361 = vpack.c.b16 %v346, %v345
    %v362 = vpack.c.b16 %v348, %v347
    %v363 = vpack.c.b16 %v350, %v349
    %v364 = vpack.c.b16 %v352, %v351
    %v365 = vpack.c.b16 %v354, %v353
    %v366 = vpack.c.b16 %v356, %v355
    %v367 = vpack.c.b16 %v358, %v357
    %v368 = vpack.c.b16 %v360, %v359
    %377 = vmatprep.subr.bf16.mxu0 0
    %378 = vmatpush1.bf16.msra.mxu0 %v368
    %379 = vmatprep.subr.bf16.mxu0 0
    %380 = vmatpush1.bf16.msra.mxu0 %v367
    %381 = vmatprep.subr.bf16.mxu0 0
    %382 = vmatpush1.bf16.msra.mxu0 %v366
    %383 = vmatprep.subr.bf16.mxu0 0
    %384 = vmatpush1.bf16.msra.mxu0 %v365
    %385 = vmatprep.subr.bf16.mxu0 0
    %386 = vmatpush1.bf16.msra.mxu0 %v364
    %387 = vmatprep.subr.bf16.mxu0 0
    %388 = vmatpush1.bf16.msra.mxu0 %v363
    %389 = vmatprep.subr.bf16.mxu0 0
    %390 = vmatpush1.bf16.msra.mxu0 %v362
    %391 = vmatprep.subr.bf16.mxu0 0
    %392 = vmatpush1.bf16.msra.mxu0 %v361
    %393 = vmatprep.subr.bf16.mxu0 0
    %394 = vmatpush2.bf16.msra.mxu0 0
    %395 = vmatprep.subr.bf16.mxu0 0
    %396 = vmatpush2.bf16.msra.mxu0 0
    %397 = vmatprep.subr.bf16.mxu0 0
    %398 = vmatpush2.bf16.msra.mxu0 0
    %399 = vmatprep.subr.bf16.mxu0 0
    %400 = vmatpush2.bf16.msra.mxu0 0
    %401 = vmatprep.subr.bf16.mxu0 0
    %402 = vmatpush2.bf16.msra.mxu0 0
    %403 = vmatprep.subr.bf16.mxu0 0
    %404 = vmatpush2.bf16.msra.mxu0 0
    %405 = vmatprep.subr.bf16.mxu0 0
    %406 = vmatpush2.bf16.msra.mxu0 0
    %407 = vmatprep.subr.bf16.mxu0 0
    %408 = vmatpush2.bf16.msra.mxu0 0
    %409 = vmatprep.mubr.bf16.mxu0 0
    %410 = vmatmul.mubr.bf16.gmra.mxu0 %v328
    %v411 = vpop.f32.mrf.mxu0
    %v412 = vadd.f32 0.0, %v411
    %v413 = vpop.f32.mrf.mxu0
    %v414 = vpop.f32.mrf.mxu0
    %v415 = vpop.f32.mrf.mxu0
    %416 = vdwg.mxu0
    %v417 = vrot.slane %v412, 4
    %v418 = vadd.f32 %v412, %v417
    %v419 = vrot.slane %v418, 2
    %v420 = vadd.f32 %v418, %v419
    %v421 = vrot.slane %v420, 1
    %v422 = vadd.f32 %v420, %v421
    %v423 = vmul.f32 %v422, %v139
    %v424 = vmul.f32 %v412, %v412
    %v425 = vrot.slane %v424, 4
    %v426 = vadd.f32 %v424, %v425
    %v427 = vrot.slane %v426, 2
    %v428 = vadd.f32 %v426, %v427
    %v429 = vrot.slane %v428, 1
    %v430 = vadd.f32 %v428, %v429
    %v431 = vmul.f32 %v430, %v139
    %v432 = vmul.f32 %v423, %v423
    %v433 = vsub.f32 %v431, %v432
    %v434 = vmax.f32 %v433, 0.0
    %v435 = vld [vmem:[#allocation7 + $0x2] sm:$0x1]
    %v436 = vld [vmem:[#allocation7 + $0xc] sm:$0x1]
    %v437 = vadd.f32 %v434, 1e-05
    %v438 = vrsqrt.pop %v437
    %v439 = vmul.f32 %v435, %v438
    %v440 = vmul.f32 %v423, %v439
    %v441 = vsub.f32 %v436, %v440
    %v442 = vlaneseq
    %v443 = vshrl.u32 %v442, 7
    %v444 = vsub.s32 0, %v443
    %v445 = vrot.slane %v439, %v444
    %v446 = vmul.f32 %v412, %v445
    %v447 = vlaneseq
    %v448 = vshrl.u32 %v447, 7
    %v449 = vsub.s32 0, %v448
    %v450 = vrot.slane %v441, %v449
    %v451 = vadd.f32 %v446, %v450
    %v452 = vmax.f32 %v451, 0.0
    %s453 = scalar_lea.vmem [#allocation6], 128
    %v454 = vld [vmem:[%s453] sm:$0xf]
    %v455 = vld [vmem:[%s453 + $0x4] sm:$0xf]
    %v456 = vld [vmem:[%s453 + $0x8] sm:$0xf]
    %v457 = vld [vmem:[%s453 + $0xc] sm:$0xf]
    %v458 = vld [vmem:[%s453 + $0x10] sm:$0xf]
    %v459 = vld [vmem:[%s453 + $0x14] sm:$0xf]
    %v460 = vld [vmem:[%s453 + $0x18] sm:$0xf]
    %v461 = vld [vmem:[%s453 + $0x1c] sm:$0xf]
    %v462 = vld [vmem:[%s453 + $0x20] sm:$0xf]
    %v463 = vld [vmem:[%s453 + $0x24] sm:$0xf]
    %v464 = vld [vmem:[%s453 + $0x28] sm:$0xf]
    %v465 = vld [vmem:[%s453 + $0x2c] sm:$0xf]
    %v466 = vld [vmem:[%s453 + $0x30] sm:$0xf]
    %v467 = vld [vmem:[%s453 + $0x34] sm:$0xf]
    %v468 = vld [vmem:[%s453 + $0x38] sm:$0xf]
    %v469 = vld [vmem:[%s453 + $0x3c] sm:$0xf]
    %v470 = vpack.c.bf16 %v452, %v452
    %v487 = vunpack.c.l.b16 %v454
    %v488 = vunpack.c.l.b16 %v455
    %v489 = vunpack.c.l.b16 %v456
    %v490 = vunpack.c.l.b16 %v457
    %v491 = vunpack.c.l.b16 %v458
    %v492 = vunpack.c.l.b16 %v459
    %v493 = vunpack.c.l.b16 %v460
    %v494 = vunpack.c.l.b16 %v461
    %v495 = vunpack.c.l.b16 %v462
    %v496 = vunpack.c.l.b16 %v463
    %v497 = vunpack.c.l.b16 %v464
    %v498 = vunpack.c.l.b16 %v465
    %v499 = vunpack.c.l.b16 %v466
    %v500 = vunpack.c.l.b16 %v467
    %v501 = vunpack.c.l.b16 %v468
    %v502 = vunpack.c.l.b16 %v469
    %v503 = vpack.c.b16 %v488, %v487
    %v504 = vpack.c.b16 %v490, %v489
    %v505 = vpack.c.b16 %v492, %v491
    %v506 = vpack.c.b16 %v494, %v493
    %v507 = vpack.c.b16 %v496, %v495
    %v508 = vpack.c.b16 %v498, %v497
    %v509 = vpack.c.b16 %v500, %v499
    %v510 = vpack.c.b16 %v502, %v501
    %519 = vmatprep.subr.bf16.mxu0 0
    %520 = vmatpush1.bf16.msra.mxu0 %v510
    %521 = vmatprep.subr.bf16.mxu0 0
    %522 = vmatpush1.bf16.msra.mxu0 %v509
    %523 = vmatprep.subr.bf16.mxu0 0
    %524 = vmatpush1.bf16.msra.mxu0 %v508
    %525 = vmatprep.subr.bf16.mxu0 0
    %526 = vmatpush1.bf16.msra.mxu0 %v507
    %527 = vmatprep.subr.bf16.mxu0 0
    %528 = vmatpush1.bf16.msra.mxu0 %v506
    %529 = vmatprep.subr.bf16.mxu0 0
    %530 = vmatpush1.bf16.msra.mxu0 %v505
    %531 = vmatprep.subr.bf16.mxu0 0
    %532 = vmatpush1.bf16.msra.mxu0 %v504
    %533 = vmatprep.subr.bf16.mxu0 0
    %534 = vmatpush1.bf16.msra.mxu0 %v503
    %535 = vmatprep.subr.bf16.mxu0 0
    %536 = vmatpush2.bf16.msra.mxu0 0
    %537 = vmatprep.subr.bf16.mxu0 0
    %538 = vmatpush2.bf16.msra.mxu0 0
    %539 = vmatprep.subr.bf16.mxu0 0
    %540 = vmatpush2.bf16.msra.mxu0 0
    %541 = vmatprep.subr.bf16.mxu0 0
    %542 = vmatpush2.bf16.msra.mxu0 0
    %543 = vmatprep.subr.bf16.mxu0 0
    %544 = vmatpush2.bf16.msra.mxu0 0
    %545 = vmatprep.subr.bf16.mxu0 0
    %546 = vmatpush2.bf16.msra.mxu0 0
    %547 = vmatprep.subr.bf16.mxu0 0
    %548 = vmatpush2.bf16.msra.mxu0 0
    %549 = vmatprep.subr.bf16.mxu0 0
    %550 = vmatpush2.bf16.msra.mxu0 0
    %551 = vmatprep.mubr.bf16.mxu0 0
    %552 = vmatmul.mubr.bf16.gmra.mxu0 %v470
    %v553 = vpop.f32.mrf.mxu0
    %v554 = vadd.f32 0.0, %v553
    %v555 = vpop.f32.mrf.mxu0
    %v556 = vpop.f32.mrf.mxu0
    %v557 = vpop.f32.mrf.mxu0
    %558 = vdwg.mxu0
    %v559 = vrot.slane %v554, 4
    %v560 = vadd.f32 %v554, %v559
    %v561 = vrot.slane %v560, 2
    %v562 = vadd.f32 %v560, %v561
    %v563 = vrot.slane %v562, 1
    %v564 = vadd.f32 %v562, %v563
    %v565 = vmul.f32 %v564, %v139
    %v566 = vmul.f32 %v554, %v554
    %v567 = vrot.slane %v566, 4
    %v568 = vadd.f32 %v566, %v567
    %v569 = vrot.slane %v568, 2
    %v570 = vadd.f32 %v568, %v569
    %v571 = vrot.slane %v570, 1
    %v572 = vadd.f32 %v570, %v571
    %v573 = vmul.f32 %v572, %v139
    %v574 = vmul.f32 %v565, %v565
    %v575 = vsub.f32 %v573, %v574
    %v576 = vmax.f32 %v575, 0.0
    %v577 = vld [vmem:[#allocation7 + $0x3] sm:$0x1]
    %v578 = vld [vmem:[#allocation7 + $0xd] sm:$0x1]
    %v579 = vadd.f32 %v576, 1e-05
    %v580 = vrsqrt.pop %v579
    %v581 = vmul.f32 %v577, %v580
    %v582 = vmul.f32 %v565, %v581
    %v583 = vsub.f32 %v578, %v582
    %v584 = vlaneseq
    %v585 = vshrl.u32 %v584, 7
    %v586 = vsub.s32 0, %v585
    %v587 = vrot.slane %v581, %v586
    %v588 = vmul.f32 %v554, %v587
    %v589 = vlaneseq
    %v590 = vshrl.u32 %v589, 7
    %v591 = vsub.s32 0, %v590
    %v592 = vrot.slane %v583, %v591
    %v593 = vadd.f32 %v588, %v592
    %v594 = vmax.f32 %v593, 0.0
    %s595 = scalar_lea.vmem [#allocation6], 192
    %v596 = vld [vmem:[%s595] sm:$0xf]
    %v597 = vld [vmem:[%s595 + $0x4] sm:$0xf]
    %v598 = vld [vmem:[%s595 + $0x8] sm:$0xf]
    %v599 = vld [vmem:[%s595 + $0xc] sm:$0xf]
    %v600 = vld [vmem:[%s595 + $0x10] sm:$0xf]
    %v601 = vld [vmem:[%s595 + $0x14] sm:$0xf]
    %v602 = vld [vmem:[%s595 + $0x18] sm:$0xf]
    %v603 = vld [vmem:[%s595 + $0x1c] sm:$0xf]
    %v604 = vld [vmem:[%s595 + $0x20] sm:$0xf]
    %v605 = vld [vmem:[%s595 + $0x24] sm:$0xf]
    %v606 = vld [vmem:[%s595 + $0x28] sm:$0xf]
    %v607 = vld [vmem:[%s595 + $0x2c] sm:$0xf]
    %v608 = vld [vmem:[%s595 + $0x30] sm:$0xf]
    %v609 = vld [vmem:[%s595 + $0x34] sm:$0xf]
    %v610 = vld [vmem:[%s595 + $0x38] sm:$0xf]
    %v611 = vld [vmem:[%s595 + $0x3c] sm:$0xf]
    %v612 = vpack.c.bf16 %v594, %v594
    %v629 = vunpack.c.l.b16 %v596
    %v630 = vunpack.c.l.b16 %v597
    %v631 = vunpack.c.l.b16 %v598
    %v632 = vunpack.c.l.b16 %v599
    %v633 = vunpack.c.l.b16 %v600
    %v634 = vunpack.c.l.b16 %v601
    %v635 = vunpack.c.l.b16 %v602
    %v636 = vunpack.c.l.b16 %v603
    %v637 = vunpack.c.l.b16 %v604
    %v638 = vunpack.c.l.b16 %v605
    %v639 = vunpack.c.l.b16 %v606
    %v640 = vunpack.c.l.b16 %v607
    %v641 = vunpack.c.l.b16 %v608
    %v642 = vunpack.c.l.b16 %v609
    %v643 = vunpack.c.l.b16 %v610
    %v644 = vunpack.c.l.b16 %v611
    %v645 = vpack.c.b16 %v630, %v629
    %v646 = vpack.c.b16 %v632, %v631
    %v647 = vpack.c.b16 %v634, %v633
    %v648 = vpack.c.b16 %v636, %v635
    %v649 = vpack.c.b16 %v638, %v637
    %v650 = vpack.c.b16 %v640, %v639
    %v651 = vpack.c.b16 %v642, %v641
    %v652 = vpack.c.b16 %v644, %v643
    %661 = vmatprep.subr.bf16.mxu0 0
    %662 = vmatpush1.bf16.msra.mxu0 %v652
    %663 = vmatprep.subr.bf16.mxu0 0
    %664 = vmatpush1.bf16.msra.mxu0 %v651
    %665 = vmatprep.subr.bf16.mxu0 0
    %666 = vmatpush1.bf16.msra.mxu0 %v650
    %667 = vmatprep.subr.bf16.mxu0 0
    %668 = vmatpush1.bf16.msra.mxu0 %v649
    %669 = vmatprep.subr.bf16.mxu0 0
    %670 = vmatpush1.bf16.msra.mxu0 %v648
    %671 = vmatprep.subr.bf16.mxu0 0
    %672 = vmatpush1.bf16.msra.mxu0 %v647
    %673 = vmatprep.subr.bf16.mxu0 0
    %674 = vmatpush1.bf16.msra.mxu0 %v646
    %675 = vmatprep.subr.bf16.mxu0 0
    %676 = vmatpush1.bf16.msra.mxu0 %v645
    %677 = vmatprep.subr.bf16.mxu0 0
    %678 = vmatpush2.bf16.msra.mxu0 0
    %679 = vmatprep.subr.bf16.mxu0 0
    %680 = vmatpush2.bf16.msra.mxu0 0
    %681 = vmatprep.subr.bf16.mxu0 0
    %682 = vmatpush2.bf16.msra.mxu0 0
    %683 = vmatprep.subr.bf16.mxu0 0
    %684 = vmatpush2.bf16.msra.mxu0 0
    %685 = vmatprep.subr.bf16.mxu0 0
    %686 = vmatpush2.bf16.msra.mxu0 0
    %687 = vmatprep.subr.bf16.mxu0 0
    %688 = vmatpush2.bf16.msra.mxu0 0
    %689 = vmatprep.subr.bf16.mxu0 0
    %690 = vmatpush2.bf16.msra.mxu0 0
    %691 = vmatprep.subr.bf16.mxu0 0
    %692 = vmatpush2.bf16.msra.mxu0 0
    %693 = vmatprep.mubr.bf16.mxu0 0
    %694 = vmatmul.mubr.bf16.gmra.mxu0 %v612
    %v695 = vpop.f32.mrf.mxu0
    %v696 = vadd.f32 0.0, %v695
    %v697 = vpop.f32.mrf.mxu0
    %v698 = vpop.f32.mrf.mxu0
    %v699 = vpop.f32.mrf.mxu0
    %700 = vdwg.mxu0
    %v701 = vrot.slane %v696, 4
    %v702 = vadd.f32 %v696, %v701
    %v703 = vrot.slane %v702, 2
    %v704 = vadd.f32 %v702, %v703
    %v705 = vrot.slane %v704, 1
    %v706 = vadd.f32 %v704, %v705
    %v707 = vmul.f32 %v706, %v139
    %v708 = vmul.f32 %v696, %v696
    %v709 = vrot.slane %v708, 4
    %v710 = vadd.f32 %v708, %v709
    %v711 = vrot.slane %v710, 2
    %v712 = vadd.f32 %v710, %v711
    %v713 = vrot.slane %v712, 1
    %v714 = vadd.f32 %v712, %v713
    %v715 = vmul.f32 %v714, %v139
    %v716 = vmul.f32 %v707, %v707
    %v717 = vsub.f32 %v715, %v716
    %v718 = vmax.f32 %v717, 0.0
    %v719 = vld [vmem:[#allocation7 + $0x4] sm:$0x1]
    %v720 = vld [vmem:[#allocation7 + $0xe] sm:$0x1]
    %v721 = vadd.f32 %v718, 1e-05
    %v722 = vrsqrt.pop %v721
    %v723 = vmul.f32 %v719, %v722
    %v724 = vmul.f32 %v707, %v723
    %v725 = vsub.f32 %v720, %v724
    %v726 = vlaneseq
    %v727 = vshrl.u32 %v726, 7
    %v728 = vsub.s32 0, %v727
    %v729 = vrot.slane %v723, %v728
    %v730 = vmul.f32 %v696, %v729
    %v731 = vlaneseq
    %v732 = vshrl.u32 %v731, 7
    %v733 = vsub.s32 0, %v732
    %v734 = vrot.slane %v725, %v733
    %v735 = vadd.f32 %v730, %v734
    %v736 = vmax.f32 %v735, 0.0
    %s737 = scalar_lea.vmem [#allocation6], 256
    %v738 = vld [vmem:[%s737] sm:$0xf]
    %v739 = vld [vmem:[%s737 + $0x4] sm:$0xf]
    %v740 = vld [vmem:[%s737 + $0x8] sm:$0xf]
    %v741 = vld [vmem:[%s737 + $0xc] sm:$0xf]
    %v742 = vld [vmem:[%s737 + $0x10] sm:$0xf]
    %v743 = vld [vmem:[%s737 + $0x14] sm:$0xf]
    %v744 = vld [vmem:[%s737 + $0x18] sm:$0xf]
    %v745 = vld [vmem:[%s737 + $0x1c] sm:$0xf]
    %v746 = vld [vmem:[%s737 + $0x20] sm:$0xf]
    %v747 = vld [vmem:[%s737 + $0x24] sm:$0xf]
    %v748 = vld [vmem:[%s737 + $0x28] sm:$0xf]
    %v749 = vld [vmem:[%s737 + $0x2c] sm:$0xf]
    %v750 = vld [vmem:[%s737 + $0x30] sm:$0xf]
    %v751 = vld [vmem:[%s737 + $0x34] sm:$0xf]
    %v752 = vld [vmem:[%s737 + $0x38] sm:$0xf]
    %v753 = vld [vmem:[%s737 + $0x3c] sm:$0xf]
    %v754 = vpack.c.bf16 %v736, %v736
    %v771 = vunpack.c.l.b16 %v738
    %v772 = vunpack.c.l.b16 %v739
    %v773 = vunpack.c.l.b16 %v740
    %v774 = vunpack.c.l.b16 %v741
    %v775 = vunpack.c.l.b16 %v742
    %v776 = vunpack.c.l.b16 %v743
    %v777 = vunpack.c.l.b16 %v744
    %v778 = vunpack.c.l.b16 %v745
    %v779 = vunpack.c.l.b16 %v746
    %v780 = vunpack.c.l.b16 %v747
    %v781 = vunpack.c.l.b16 %v748
    %v782 = vunpack.c.l.b16 %v749
    %v783 = vunpack.c.l.b16 %v750
    %v784 = vunpack.c.l.b16 %v751
    %v785 = vunpack.c.l.b16 %v752
    %v786 = vunpack.c.l.b16 %v753
    %v787 = vpack.c.b16 %v772, %v771
    %v788 = vpack.c.b16 %v774, %v773
    %v789 = vpack.c.b16 %v776, %v775
    %v790 = vpack.c.b16 %v778, %v777
    %v791 = vpack.c.b16 %v780, %v779
    %v792 = vpack.c.b16 %v782, %v781
    %v793 = vpack.c.b16 %v784, %v783
    %v794 = vpack.c.b16 %v786, %v785
    %803 = vmatprep.subr.bf16.mxu0 0
    %804 = vmatpush1.bf16.msra.mxu0 %v794
    %805 = vmatprep.subr.bf16.mxu0 0
    %806 = vmatpush1.bf16.msra.mxu0 %v793
    %807 = vmatprep.subr.bf16.mxu0 0
    %808 = vmatpush1.bf16.msra.mxu0 %v792
    %809 = vmatprep.subr.bf16.mxu0 0
    %810 = vmatpush1.bf16.msra.mxu0 %v791
    %811 = vmatprep.subr.bf16.mxu0 0
    %812 = vmatpush1.bf16.msra.mxu0 %v790
    %813 = vmatprep.subr.bf16.mxu0 0
    %814 = vmatpush1.bf16.msra.mxu0 %v789
    %815 = vmatprep.subr.bf16.mxu0 0
    %816 = vmatpush1.bf16.msra.mxu0 %v788
    %817 = vmatprep.subr.bf16.mxu0 0
    %818 = vmatpush1.bf16.msra.mxu0 %v787
    %819 = vmatprep.subr.bf16.mxu0 0
    %820 = vmatpush2.bf16.msra.mxu0 0
    %821 = vmatprep.subr.bf16.mxu0 0
    %822 = vmatpush2.bf16.msra.mxu0 0
    %823 = vmatprep.subr.bf16.mxu0 0
    %824 = vmatpush2.bf16.msra.mxu0 0
    %825 = vmatprep.subr.bf16.mxu0 0
    %826 = vmatpush2.bf16.msra.mxu0 0
    %827 = vmatprep.subr.bf16.mxu0 0
    %828 = vmatpush2.bf16.msra.mxu0 0
    %829 = vmatprep.subr.bf16.mxu0 0
    %830 = vmatpush2.bf16.msra.mxu0 0
    %831 = vmatprep.subr.bf16.mxu0 0
    %832 = vmatpush2.bf16.msra.mxu0 0
    %833 = vmatprep.subr.bf16.mxu0 0
    %834 = vmatpush2.bf16.msra.mxu0 0
    %835 = vmatprep.mubr.bf16.mxu0 0
    %836 = vmatmul.mubr.bf16.gmra.mxu0 %v754
    %v837 = vpop.f32.mrf.mxu0
    %v838 = vadd.f32 0.0, %v837
    %v839 = vpop.f32.mrf.mxu0
    %v840 = vpop.f32.mrf.mxu0
    %v841 = vpop.f32.mrf.mxu0
    %842 = vdwg.mxu0
    %v843 = vrot.slane %v838, 4
    %v844 = vadd.f32 %v838, %v843
    %v845 = vrot.slane %v844, 2
    %v846 = vadd.f32 %v844, %v845
    %v847 = vrot.slane %v846, 1
    %v848 = vadd.f32 %v846, %v847
    %v849 = vmul.f32 %v848, %v139
    %v850 = vmul.f32 %v838, %v838
    %v851 = vrot.slane %v850, 4
    %v852 = vadd.f32 %v850, %v851
    %v853 = vrot.slane %v852, 2
    %v854 = vadd.f32 %v852, %v853
    %v855 = vrot.slane %v854, 1
    %v856 = vadd.f32 %v854, %v855
    %v857 = vmul.f32 %v856, %v139
    %v858 = vmul.f32 %v849, %v849
    %v859 = vsub.f32 %v857, %v858
    %v860 = vmax.f32 %v859, 0.0
    %v861 = vld [vmem:[#allocation7 + $0x5] sm:$0x1]
    %v862 = vld [vmem:[#allocation7 + $0xf] sm:$0x1]
    %v863 = vadd.f32 %v860, 1e-05
    %v864 = vrsqrt.pop %v863
    %v865 = vmul.f32 %v861, %v864
    %v866 = vmul.f32 %v849, %v865
    %v867 = vsub.f32 %v862, %v866
    %v868 = vlaneseq
    %v869 = vshrl.u32 %v868, 7
    %v870 = vsub.s32 0, %v869
    %v871 = vrot.slane %v865, %v870
    %v872 = vmul.f32 %v838, %v871
    %v873 = vlaneseq
    %v874 = vshrl.u32 %v873, 7
    %v875 = vsub.s32 0, %v874
    %v876 = vrot.slane %v867, %v875
    %v877 = vadd.f32 %v872, %v876
    %v878 = vmax.f32 %v877, 0.0
    %s879 = scalar_lea.vmem [#allocation6], 320
    %v880 = vld [vmem:[%s879] sm:$0xf]
    %v881 = vld [vmem:[%s879 + $0x4] sm:$0xf]
    %v882 = vld [vmem:[%s879 + $0x8] sm:$0xf]
    %v883 = vld [vmem:[%s879 + $0xc] sm:$0xf]
    %v884 = vld [vmem:[%s879 + $0x10] sm:$0xf]
    %v885 = vld [vmem:[%s879 + $0x14] sm:$0xf]
    %v886 = vld [vmem:[%s879 + $0x18] sm:$0xf]
    %v887 = vld [vmem:[%s879 + $0x1c] sm:$0xf]
    %v888 = vld [vmem:[%s879 + $0x20] sm:$0xf]
    %v889 = vld [vmem:[%s879 + $0x24] sm:$0xf]
    %v890 = vld [vmem:[%s879 + $0x28] sm:$0xf]
    %v891 = vld [vmem:[%s879 + $0x2c] sm:$0xf]
    %v892 = vld [vmem:[%s879 + $0x30] sm:$0xf]
    %v893 = vld [vmem:[%s879 + $0x34] sm:$0xf]
    %v894 = vld [vmem:[%s879 + $0x38] sm:$0xf]
    %v895 = vld [vmem:[%s879 + $0x3c] sm:$0xf]
    %v896 = vpack.c.bf16 %v878, %v878
    %v913 = vunpack.c.l.b16 %v880
    %v914 = vunpack.c.l.b16 %v881
    %v915 = vunpack.c.l.b16 %v882
    %v916 = vunpack.c.l.b16 %v883
    %v917 = vunpack.c.l.b16 %v884
    %v918 = vunpack.c.l.b16 %v885
    %v919 = vunpack.c.l.b16 %v886
    %v920 = vunpack.c.l.b16 %v887
    %v921 = vunpack.c.l.b16 %v888
    %v922 = vunpack.c.l.b16 %v889
    %v923 = vunpack.c.l.b16 %v890
    %v924 = vunpack.c.l.b16 %v891
    %v925 = vunpack.c.l.b16 %v892
    %v926 = vunpack.c.l.b16 %v893
    %v927 = vunpack.c.l.b16 %v894
    %v928 = vunpack.c.l.b16 %v895
    %v929 = vpack.c.b16 %v914, %v913
    %v930 = vpack.c.b16 %v916, %v915
    %v931 = vpack.c.b16 %v918, %v917
    %v932 = vpack.c.b16 %v920, %v919
    %v933 = vpack.c.b16 %v922, %v921
    %v934 = vpack.c.b16 %v924, %v923
    %v935 = vpack.c.b16 %v926, %v925
    %v936 = vpack.c.b16 %v928, %v927
    %945 = vmatprep.subr.bf16.mxu0 0
    %946 = vmatpush1.bf16.msra.mxu0 %v936
    %947 = vmatprep.subr.bf16.mxu0 0
    %948 = vmatpush1.bf16.msra.mxu0 %v935
    %949 = vmatprep.subr.bf16.mxu0 0
    %950 = vmatpush1.bf16.msra.mxu0 %v934
    %951 = vmatprep.subr.bf16.mxu0 0
    %952 = vmatpush1.bf16.msra.mxu0 %v933
    %953 = vmatprep.subr.bf16.mxu0 0
    %954 = vmatpush1.bf16.msra.mxu0 %v932
    %955 = vmatprep.subr.bf16.mxu0 0
    %956 = vmatpush1.bf16.msra.mxu0 %v931
    %957 = vmatprep.subr.bf16.mxu0 0
    %958 = vmatpush1.bf16.msra.mxu0 %v930
    %959 = vmatprep.subr.bf16.mxu0 0
    %960 = vmatpush1.bf16.msra.mxu0 %v929
    %961 = vmatprep.subr.bf16.mxu0 0
    %962 = vmatpush2.bf16.msra.mxu0 0
    %963 = vmatprep.subr.bf16.mxu0 0
    %964 = vmatpush2.bf16.msra.mxu0 0
    %965 = vmatprep.subr.bf16.mxu0 0
    %966 = vmatpush2.bf16.msra.mxu0 0
    %967 = vmatprep.subr.bf16.mxu0 0
    %968 = vmatpush2.bf16.msra.mxu0 0
    %969 = vmatprep.subr.bf16.mxu0 0
    %970 = vmatpush2.bf16.msra.mxu0 0
    %971 = vmatprep.subr.bf16.mxu0 0
    %972 = vmatpush2.bf16.msra.mxu0 0
    %973 = vmatprep.subr.bf16.mxu0 0
    %974 = vmatpush2.bf16.msra.mxu0 0
    %975 = vmatprep.subr.bf16.mxu0 0
    %976 = vmatpush2.bf16.msra.mxu0 0
    %977 = vmatprep.mubr.bf16.mxu0 0
    %978 = vmatmul.mubr.bf16.gmra.mxu0 %v896
    %v979 = vpop.f32.mrf.mxu0
    %v980 = vadd.f32 0.0, %v979
    %v981 = vpop.f32.mrf.mxu0
    %v982 = vpop.f32.mrf.mxu0
    %v983 = vpop.f32.mrf.mxu0
    %984 = vdwg.mxu0
    %v985 = vrot.slane %v980, 4
    %v986 = vadd.f32 %v980, %v985
    %v987 = vrot.slane %v986, 2
    %v988 = vadd.f32 %v986, %v987
    %v989 = vrot.slane %v988, 1
    %v990 = vadd.f32 %v988, %v989
    %v991 = vmul.f32 %v990, %v139
    %v992 = vmul.f32 %v980, %v980
    %v993 = vrot.slane %v992, 4
    %v994 = vadd.f32 %v992, %v993
    %v995 = vrot.slane %v994, 2
    %v996 = vadd.f32 %v994, %v995
    %v997 = vrot.slane %v996, 1
    %v998 = vadd.f32 %v996, %v997
    %v999 = vmul.f32 %v998, %v139
    %v1000 = vmul.f32 %v991, %v991
    %v1001 = vsub.f32 %v999, %v1000
    %v1002 = vmax.f32 %v1001, 0.0
    %v1003 = vld [vmem:[#allocation7 + $0x6] sm:$0x1]
    %v1004 = vld [vmem:[#allocation7 + $0x10] sm:$0x1]
    %v1005 = vadd.f32 %v1002, 1e-05
    %v1006 = vrsqrt.pop %v1005
    %v1007 = vmul.f32 %v1003, %v1006
    %v1008 = vmul.f32 %v991, %v1007
    %v1009 = vsub.f32 %v1004, %v1008
    %v1010 = vlaneseq
    %v1011 = vshrl.u32 %v1010, 7
    %v1012 = vsub.s32 0, %v1011
    %v1013 = vrot.slane %v1007, %v1012
    %v1014 = vmul.f32 %v980, %v1013
    %v1015 = vlaneseq
    %v1016 = vshrl.u32 %v1015, 7
    %v1017 = vsub.s32 0, %v1016
    %v1018 = vrot.slane %v1009, %v1017
    %v1019 = vadd.f32 %v1014, %v1018
    %v1020 = vmax.f32 %v1019, 0.0
    %s1021 = scalar_lea.vmem [#allocation6], 384
    %v1022 = vld [vmem:[%s1021] sm:$0xf]
    %v1023 = vld [vmem:[%s1021 + $0x4] sm:$0xf]
    %v1024 = vld [vmem:[%s1021 + $0x8] sm:$0xf]
    %v1025 = vld [vmem:[%s1021 + $0xc] sm:$0xf]
    %v1026 = vld [vmem:[%s1021 + $0x10] sm:$0xf]
    %v1027 = vld [vmem:[%s1021 + $0x14] sm:$0xf]
    %v1028 = vld [vmem:[%s1021 + $0x18] sm:$0xf]
    %v1029 = vld [vmem:[%s1021 + $0x1c] sm:$0xf]
    %v1030 = vld [vmem:[%s1021 + $0x20] sm:$0xf]
    %v1031 = vld [vmem:[%s1021 + $0x24] sm:$0xf]
    %v1032 = vld [vmem:[%s1021 + $0x28] sm:$0xf]
    %v1033 = vld [vmem:[%s1021 + $0x2c] sm:$0xf]
    %v1034 = vld [vmem:[%s1021 + $0x30] sm:$0xf]
    %v1035 = vld [vmem:[%s1021 + $0x34] sm:$0xf]
    %v1036 = vld [vmem:[%s1021 + $0x38] sm:$0xf]
    %v1037 = vld [vmem:[%s1021 + $0x3c] sm:$0xf]
    %v1038 = vpack.c.bf16 %v1020, %v1020
    %v1055 = vunpack.c.l.b16 %v1022
    %v1056 = vunpack.c.l.b16 %v1023
    %v1057 = vunpack.c.l.b16 %v1024
    %v1058 = vunpack.c.l.b16 %v1025
    %v1059 = vunpack.c.l.b16 %v1026
    %v1060 = vunpack.c.l.b16 %v1027
    %v1061 = vunpack.c.l.b16 %v1028
    %v1062 = vunpack.c.l.b16 %v1029
    %v1063 = vunpack.c.l.b16 %v1030
    %v1064 = vunpack.c.l.b16 %v1031
    %v1065 = vunpack.c.l.b16 %v1032
    %v1066 = vunpack.c.l.b16 %v1033
    %v1067 = vunpack.c.l.b16 %v1034
    %v1068 = vunpack.c.l.b16 %v1035
    %v1069 = vunpack.c.l.b16 %v1036
    %v1070 = vunpack.c.l.b16 %v1037
    %v1071 = vpack.c.b16 %v1056, %v1055
    %v1072 = vpack.c.b16 %v1058, %v1057
    %v1073 = vpack.c.b16 %v1060, %v1059
    %v1074 = vpack.c.b16 %v1062, %v1061
    %v1075 = vpack.c.b16 %v1064, %v1063
    %v1076 = vpack.c.b16 %v1066, %v1065
    %v1077 = vpack.c.b16 %v1068, %v1067
    %v1078 = vpack.c.b16 %v1070, %v1069
    %1087 = vmatprep.subr.bf16.mxu0 0
    %1088 = vmatpush1.bf16.msra.mxu0 %v1078
    %1089 = vmatprep.subr.bf16.mxu0 0
    %1090 = vmatpush1.bf16.msra.mxu0 %v1077
    %1091 = vmatprep.subr.bf16.mxu0 0
    %1092 = vmatpush1.bf16.msra.mxu0 %v1076
    %1093 = vmatprep.subr.bf16.mxu0 0
    %1094 = vmatpush1.bf16.msra.mxu0 %v1075
    %1095 = vmatprep.subr.bf16.mxu0 0
    %1096 = vmatpush1.bf16.msra.mxu0 %v1074
    %1097 = vmatprep.subr.bf16.mxu0 0
    %1098 = vmatpush1.bf16.msra.mxu0 %v1073
    %1099 = vmatprep.subr.bf16.mxu0 0
    %1100 = vmatpush1.bf16.msra.mxu0 %v1072
    %1101 = vmatprep.subr.bf16.mxu0 0
    %1102 = vmatpush1.bf16.msra.mxu0 %v1071
    %1103 = vmatprep.subr.bf16.mxu0 0
    %1104 = vmatpush2.bf16.msra.mxu0 0
    %1105 = vmatprep.subr.bf16.mxu0 0
    %1106 = vmatpush2.bf16.msra.mxu0 0
    %1107 = vmatprep.subr.bf16.mxu0 0
    %1108 = vmatpush2.bf16.msra.mxu0 0
    %1109 = vmatprep.subr.bf16.mxu0 0
    %1110 = vmatpush2.bf16.msra.mxu0 0
    %1111 = vmatprep.subr.bf16.mxu0 0
    %1112 = vmatpush2.bf16.msra.mxu0 0
    %1113 = vmatprep.subr.bf16.mxu0 0
    %1114 = vmatpush2.bf16.msra.mxu0 0
    %1115 = vmatprep.subr.bf16.mxu0 0
    %1116 = vmatpush2.bf16.msra.mxu0 0
    %1117 = vmatprep.subr.bf16.mxu0 0
    %1118 = vmatpush2.bf16.msra.mxu0 0
    %1119 = vmatprep.mubr.bf16.mxu0 0
    %1120 = vmatmul.mubr.bf16.gmra.mxu0 %v1038
    %v1121 = vpop.f32.mrf.mxu0
    %v1122 = vadd.f32 0.0, %v1121
    %v1123 = vpop.f32.mrf.mxu0
    %v1124 = vpop.f32.mrf.mxu0
    %v1125 = vpop.f32.mrf.mxu0
    %1126 = vdwg.mxu0
    %v1127 = vrot.slane %v1122, 4
    %v1128 = vadd.f32 %v1122, %v1127
    %v1129 = vrot.slane %v1128, 2
    %v1130 = vadd.f32 %v1128, %v1129
    %v1131 = vrot.slane %v1130, 1
    %v1132 = vadd.f32 %v1130, %v1131
    %v1133 = vmul.f32 %v1132, %v139
    %v1134 = vmul.f32 %v1122, %v1122
    %v1135 = vrot.slane %v1134, 4
    %v1136 = vadd.f32 %v1134, %v1135
    %v1137 = vrot.slane %v1136, 2
    %v1138 = vadd.f32 %v1136, %v1137
    %v1139 = vrot.slane %v1138, 1
    %v1140 = vadd.f32 %v1138, %v1139
    %v1141 = vmul.f32 %v1140, %v139
    %v1142 = vmul.f32 %v1133, %v1133
    %v1143 = vsub.f32 %v1141, %v1142
    %v1144 = vmax.f32 %v1143, 0.0
    %v1145 = vld [vmem:[#allocation7 + $0x7] sm:$0x1]
    %v1146 = vld [vmem:[#allocation7 + $0x11] sm:$0x1]
    %v1147 = vadd.f32 %v1144, 1e-05
    %v1148 = vrsqrt.pop %v1147
    %v1149 = vmul.f32 %v1145, %v1148
    %v1150 = vmul.f32 %v1133, %v1149
    %v1151 = vsub.f32 %v1146, %v1150
    %v1152 = vlaneseq
    %v1153 = vshrl.u32 %v1152, 7
    %v1154 = vsub.s32 0, %v1153
    %v1155 = vrot.slane %v1149, %v1154
    %v1156 = vmul.f32 %v1122, %v1155
    %v1157 = vlaneseq
    %v1158 = vshrl.u32 %v1157, 7
    %v1159 = vsub.s32 0, %v1158
    %v1160 = vrot.slane %v1151, %v1159
    %v1161 = vadd.f32 %v1156, %v1160
    %v1162 = vmax.f32 %v1161, 0.0
    %s1163 = scalar_lea.vmem [#allocation6], 448
    %v1164 = vld [vmem:[%s1163] sm:$0xf]
    %v1165 = vld [vmem:[%s1163 + $0x4] sm:$0xf]
    %v1166 = vld [vmem:[%s1163 + $0x8] sm:$0xf]
    %v1167 = vld [vmem:[%s1163 + $0xc] sm:$0xf]
    %v1168 = vld [vmem:[%s1163 + $0x10] sm:$0xf]
    %v1169 = vld [vmem:[%s1163 + $0x14] sm:$0xf]
    %v1170 = vld [vmem:[%s1163 + $0x18] sm:$0xf]
    %v1171 = vld [vmem:[%s1163 + $0x1c] sm:$0xf]
    %v1172 = vld [vmem:[%s1163 + $0x20] sm:$0xf]
    %v1173 = vld [vmem:[%s1163 + $0x24] sm:$0xf]
    %v1174 = vld [vmem:[%s1163 + $0x28] sm:$0xf]
    %v1175 = vld [vmem:[%s1163 + $0x2c] sm:$0xf]
    %v1176 = vld [vmem:[%s1163 + $0x30] sm:$0xf]
    %v1177 = vld [vmem:[%s1163 + $0x34] sm:$0xf]
    %v1178 = vld [vmem:[%s1163 + $0x38] sm:$0xf]
    %v1179 = vld [vmem:[%s1163 + $0x3c] sm:$0xf]
    %v1180 = vpack.c.bf16 %v1162, %v1162
    %v1197 = vunpack.c.l.b16 %v1164
    %v1198 = vunpack.c.l.b16 %v1165
    %v1199 = vunpack.c.l.b16 %v1166
    %v1200 = vunpack.c.l.b16 %v1167
    %v1201 = vunpack.c.l.b16 %v1168
    %v1202 = vunpack.c.l.b16 %v1169
    %v1203 = vunpack.c.l.b16 %v1170
    %v1204 = vunpack.c.l.b16 %v1171
    %v1205 = vunpack.c.l.b16 %v1172
    %v1206 = vunpack.c.l.b16 %v1173
    %v1207 = vunpack.c.l.b16 %v1174
    %v1208 = vunpack.c.l.b16 %v1175
    %v1209 = vunpack.c.l.b16 %v1176
    %v1210 = vunpack.c.l.b16 %v1177
    %v1211 = vunpack.c.l.b16 %v1178
    %v1212 = vunpack.c.l.b16 %v1179
    %v1213 = vpack.c.b16 %v1198, %v1197
    %v1214 = vpack.c.b16 %v1200, %v1199
    %v1215 = vpack.c.b16 %v1202, %v1201
    %v1216 = vpack.c.b16 %v1204, %v1203
    %v1217 = vpack.c.b16 %v1206, %v1205
    %v1218 = vpack.c.b16 %v1208, %v1207
    %v1219 = vpack.c.b16 %v1210, %v1209
    %v1220 = vpack.c.b16 %v1212, %v1211
    %1229 = vmatprep.subr.bf16.mxu0 0
    %1230 = vmatpush1.bf16.msra.mxu0 %v1220
    %1231 = vmatprep.subr.bf16.mxu0 0
    %1232 = vmatpush1.bf16.msra.mxu0 %v1219
    %1233 = vmatprep.subr.bf16.mxu0 0
    %1234 = vmatpush1.bf16.msra.mxu0 %v1218
    %1235 = vmatprep.subr.bf16.mxu0 0
    %1236 = vmatpush1.bf16.msra.mxu0 %v1217
    %1237 = vmatprep.subr.bf16.mxu0 0
    %1238 = vmatpush1.bf16.msra.mxu0 %v1216
    %1239 = vmatprep.subr.bf16.mxu0 0
    %1240 = vmatpush1.bf16.msra.mxu0 %v1215
    %1241 = vmatprep.subr.bf16.mxu0 0
    %1242 = vmatpush1.bf16.msra.mxu0 %v1214
    %1243 = vmatprep.subr.bf16.mxu0 0
    %1244 = vmatpush1.bf16.msra.mxu0 %v1213
    %1245 = vmatprep.subr.bf16.mxu0 0
    %1246 = vmatpush2.bf16.msra.mxu0 0
    %1247 = vmatprep.subr.bf16.mxu0 0
    %1248 = vmatpush2.bf16.msra.mxu0 0
    %1249 = vmatprep.subr.bf16.mxu0 0
    %1250 = vmatpush2.bf16.msra.mxu0 0
    %1251 = vmatprep.subr.bf16.mxu0 0
    %1252 = vmatpush2.bf16.msra.mxu0 0
    %1253 = vmatprep.subr.bf16.mxu0 0
    %1254 = vmatpush2.bf16.msra.mxu0 0
    %1255 = vmatprep.subr.bf16.mxu0 0
    %1256 = vmatpush2.bf16.msra.mxu0 0
    %1257 = vmatprep.subr.bf16.mxu0 0
    %1258 = vmatpush2.bf16.msra.mxu0 0
    %1259 = vmatprep.subr.bf16.mxu0 0
    %1260 = vmatpush2.bf16.msra.mxu0 0
    %1261 = vmatprep.mubr.bf16.mxu0 0
    %1262 = vmatmul.mubr.bf16.gmra.mxu0 %v1180
    %v1263 = vpop.f32.mrf.mxu0
    %v1264 = vadd.f32 0.0, %v1263
    %v1265 = vpop.f32.mrf.mxu0
    %v1266 = vpop.f32.mrf.mxu0
    %v1267 = vpop.f32.mrf.mxu0
    %1268 = vdwg.mxu0
    %v1269 = vrot.slane %v1264, 4
    %v1270 = vadd.f32 %v1264, %v1269
    %v1271 = vrot.slane %v1270, 2
    %v1272 = vadd.f32 %v1270, %v1271
    %v1273 = vrot.slane %v1272, 1
    %v1274 = vadd.f32 %v1272, %v1273
    %v1275 = vmul.f32 %v1274, %v139
    %v1276 = vmul.f32 %v1264, %v1264
    %v1277 = vrot.slane %v1276, 4
    %v1278 = vadd.f32 %v1276, %v1277
    %v1279 = vrot.slane %v1278, 2
    %v1280 = vadd.f32 %v1278, %v1279
    %v1281 = vrot.slane %v1280, 1
    %v1282 = vadd.f32 %v1280, %v1281
    %v1283 = vmul.f32 %v1282, %v139
    %v1284 = vmul.f32 %v1275, %v1275
    %v1285 = vsub.f32 %v1283, %v1284
    %v1286 = vmax.f32 %v1285, 0.0
    %v1287 = vld [vmem:[#allocation7 + $0x8] sm:$0x1]
    %v1288 = vld [vmem:[#allocation7 + $0x12] sm:$0x1]
    %v1289 = vadd.f32 %v1286, 1e-05
    %v1290 = vrsqrt.pop %v1289
    %v1291 = vmul.f32 %v1287, %v1290
    %v1292 = vmul.f32 %v1275, %v1291
    %v1293 = vsub.f32 %v1288, %v1292
    %v1294 = vlaneseq
    %v1295 = vshrl.u32 %v1294, 7
    %v1296 = vsub.s32 0, %v1295
    %v1297 = vrot.slane %v1291, %v1296
    %v1298 = vmul.f32 %v1264, %v1297
    %v1299 = vlaneseq
    %v1300 = vshrl.u32 %v1299, 7
    %v1301 = vsub.s32 0, %v1300
    %v1302 = vrot.slane %v1293, %v1301
    %v1303 = vadd.f32 %v1298, %v1302
    %v1304 = vmax.f32 %v1303, 0.0
    %s1305 = scalar_lea.vmem [#allocation6], 512
    %v1306 = vld [vmem:[%s1305] sm:$0xf]
    %v1307 = vld [vmem:[%s1305 + $0x4] sm:$0xf]
    %v1308 = vld [vmem:[%s1305 + $0x8] sm:$0xf]
    %v1309 = vld [vmem:[%s1305 + $0xc] sm:$0xf]
    %v1310 = vld [vmem:[%s1305 + $0x10] sm:$0xf]
    %v1311 = vld [vmem:[%s1305 + $0x14] sm:$0xf]
    %v1312 = vld [vmem:[%s1305 + $0x18] sm:$0xf]
    %v1313 = vld [vmem:[%s1305 + $0x1c] sm:$0xf]
    %v1314 = vld [vmem:[%s1305 + $0x20] sm:$0xf]
    %v1315 = vld [vmem:[%s1305 + $0x24] sm:$0xf]
    %v1316 = vld [vmem:[%s1305 + $0x28] sm:$0xf]
    %v1317 = vld [vmem:[%s1305 + $0x2c] sm:$0xf]
    %v1318 = vld [vmem:[%s1305 + $0x30] sm:$0xf]
    %v1319 = vld [vmem:[%s1305 + $0x34] sm:$0xf]
    %v1320 = vld [vmem:[%s1305 + $0x38] sm:$0xf]
    %v1321 = vld [vmem:[%s1305 + $0x3c] sm:$0xf]
    %v1322 = vpack.c.bf16 %v1304, %v1304
    %v1339 = vunpack.c.l.b16 %v1306
    %v1340 = vunpack.c.l.b16 %v1307
    %v1341 = vunpack.c.l.b16 %v1308
    %v1342 = vunpack.c.l.b16 %v1309
    %v1343 = vunpack.c.l.b16 %v1310
    %v1344 = vunpack.c.l.b16 %v1311
    %v1345 = vunpack.c.l.b16 %v1312
    %v1346 = vunpack.c.l.b16 %v1313
    %v1347 = vunpack.c.l.b16 %v1314
    %v1348 = vunpack.c.l.b16 %v1315
    %v1349 = vunpack.c.l.b16 %v1316
    %v1350 = vunpack.c.l.b16 %v1317
    %v1351 = vunpack.c.l.b16 %v1318
    %v1352 = vunpack.c.l.b16 %v1319
    %v1353 = vunpack.c.l.b16 %v1320
    %v1354 = vunpack.c.l.b16 %v1321
    %v1355 = vpack.c.b16 %v1340, %v1339
    %v1356 = vpack.c.b16 %v1342, %v1341
    %v1357 = vpack.c.b16 %v1344, %v1343
    %v1358 = vpack.c.b16 %v1346, %v1345
    %v1359 = vpack.c.b16 %v1348, %v1347
    %v1360 = vpack.c.b16 %v1350, %v1349
    %v1361 = vpack.c.b16 %v1352, %v1351
    %v1362 = vpack.c.b16 %v1354, %v1353
    %1371 = vmatprep.subr.bf16.mxu0 0
    %1372 = vmatpush1.bf16.msra.mxu0 %v1362
    %1373 = vmatprep.subr.bf16.mxu0 0
    %1374 = vmatpush1.bf16.msra.mxu0 %v1361
    %1375 = vmatprep.subr.bf16.mxu0 0
    %1376 = vmatpush1.bf16.msra.mxu0 %v1360
    %1377 = vmatprep.subr.bf16.mxu0 0
    %1378 = vmatpush1.bf16.msra.mxu0 %v1359
    %1379 = vmatprep.subr.bf16.mxu0 0
    %1380 = vmatpush1.bf16.msra.mxu0 %v1358
    %1381 = vmatprep.subr.bf16.mxu0 0
    %1382 = vmatpush1.bf16.msra.mxu0 %v1357
    %1383 = vmatprep.subr.bf16.mxu0 0
    %1384 = vmatpush1.bf16.msra.mxu0 %v1356
    %1385 = vmatprep.subr.bf16.mxu0 0
    %1386 = vmatpush1.bf16.msra.mxu0 %v1355
    %1387 = vmatprep.subr.bf16.mxu0 0
    %1388 = vmatpush2.bf16.msra.mxu0 0
    %1389 = vmatprep.subr.bf16.mxu0 0
    %1390 = vmatpush2.bf16.msra.mxu0 0
    %1391 = vmatprep.subr.bf16.mxu0 0
    %1392 = vmatpush2.bf16.msra.mxu0 0
    %1393 = vmatprep.subr.bf16.mxu0 0
    %1394 = vmatpush2.bf16.msra.mxu0 0
    %1395 = vmatprep.subr.bf16.mxu0 0
    %1396 = vmatpush2.bf16.msra.mxu0 0
    %1397 = vmatprep.subr.bf16.mxu0 0
    %1398 = vmatpush2.bf16.msra.mxu0 0
    %1399 = vmatprep.subr.bf16.mxu0 0
    %1400 = vmatpush2.bf16.msra.mxu0 0
    %1401 = vmatprep.subr.bf16.mxu0 0
    %1402 = vmatpush2.bf16.msra.mxu0 0
    %1403 = vmatprep.mubr.bf16.mxu0 0
    %1404 = vmatmul.mubr.bf16.gmra.mxu0 %v1322
    %v1405 = vpop.f32.mrf.mxu0
    %v1406 = vadd.f32 0.0, %v1405
    %v1407 = vpop.f32.mrf.mxu0
    %v1408 = vpop.f32.mrf.mxu0
    %v1409 = vpop.f32.mrf.mxu0
    %1410 = vdwg.mxu0
    %v1411 = vrot.slane %v1406, 4
    %v1412 = vadd.f32 %v1406, %v1411
    %v1413 = vrot.slane %v1412, 2
    %v1414 = vadd.f32 %v1412, %v1413
    %v1415 = vrot.slane %v1414, 1
    %v1416 = vadd.f32 %v1414, %v1415
    %v1417 = vmul.f32 %v1416, %v139
    %v1418 = vmul.f32 %v1406, %v1406
    %v1419 = vrot.slane %v1418, 4
    %v1420 = vadd.f32 %v1418, %v1419
    %v1421 = vrot.slane %v1420, 2
    %v1422 = vadd.f32 %v1420, %v1421
    %v1423 = vrot.slane %v1422, 1
    %v1424 = vadd.f32 %v1422, %v1423
    %v1425 = vmul.f32 %v1424, %v139
    %v1426 = vmul.f32 %v1417, %v1417
    %v1427 = vsub.f32 %v1425, %v1426
    %v1428 = vmax.f32 %v1427, 0.0
    %v1429 = vld [vmem:[#allocation7 + $0x9] sm:$0x1]
    %v1430 = vld [vmem:[#allocation7 + $0x13] sm:$0x1]
    %v1431 = vadd.f32 %v1428, 1e-05
    %v1432 = vrsqrt.pop %v1431
    %v1433 = vmul.f32 %v1429, %v1432
    %v1434 = vmul.f32 %v1417, %v1433
    %v1435 = vsub.f32 %v1430, %v1434
    %v1436 = vlaneseq
    %v1437 = vshrl.u32 %v1436, 7
    %v1438 = vsub.s32 0, %v1437
    %v1439 = vrot.slane %v1433, %v1438
    %v1440 = vmul.f32 %v1406, %v1439
    %v1441 = vlaneseq
    %v1442 = vshrl.u32 %v1441, 7
    %v1443 = vsub.s32 0, %v1442
    %v1444 = vrot.slane %v1435, %v1443
    %v1445 = vadd.f32 %v1440, %v1444
    %v1446 = vmax.f32 %v1445, 0.0
    %s1447 = scalar_lea.vmem [#allocation6], 576
    %v1448 = vld [vmem:[%s1447] sm:$0xf]
    %v1449 = vld [vmem:[%s1447 + $0x4] sm:$0xf]
    %v1450 = vld [vmem:[%s1447 + $0x8] sm:$0xf]
    %v1451 = vld [vmem:[%s1447 + $0xc] sm:$0xf]
    %v1452 = vld [vmem:[%s1447 + $0x10] sm:$0xf]
    %v1453 = vld [vmem:[%s1447 + $0x14] sm:$0xf]
    %v1454 = vld [vmem:[%s1447 + $0x18] sm:$0xf]
    %v1455 = vld [vmem:[%s1447 + $0x1c] sm:$0xf]
    %v1456 = vld [vmem:[%s1447 + $0x20] sm:$0xf]
    %v1457 = vld [vmem:[%s1447 + $0x24] sm:$0xf]
    %v1458 = vld [vmem:[%s1447 + $0x28] sm:$0xf]
    %v1459 = vld [vmem:[%s1447 + $0x2c] sm:$0xf]
    %v1460 = vld [vmem:[%s1447 + $0x30] sm:$0xf]
    %v1461 = vld [vmem:[%s1447 + $0x34] sm:$0xf]
    %v1462 = vld [vmem:[%s1447 + $0x38] sm:$0xf]
    %v1463 = vld [vmem:[%s1447 + $0x3c] sm:$0xf]
    %v1464 = vpack.c.bf16 %v1446, %v1446
    %v1465 = vld [vmem:[#allocation7 + $0x14] sm:$0x1]
    %v1466 = vlaneseq
    %v1467 = vshrl.u32 %v1466, 7
    %v1468 = vsub.s32 0, %v1467
    %v1469 = vrot.slane %v1465, %v1468
    %v1486 = vunpack.c.l.b16 %v1448
    %v1487 = vunpack.c.l.b16 %v1449
    %v1488 = vunpack.c.l.b16 %v1450
    %v1489 = vunpack.c.l.b16 %v1451
    %v1490 = vunpack.c.l.b16 %v1452
    %v1491 = vunpack.c.l.b16 %v1453
    %v1492 = vunpack.c.l.b16 %v1454
    %v1493 = vunpack.c.l.b16 %v1455
    %v1494 = vunpack.c.l.b16 %v1456
    %v1495 = vunpack.c.l.b16 %v1457
    %v1496 = vunpack.c.l.b16 %v1458
    %v1497 = vunpack.c.l.b16 %v1459
    %v1498 = vunpack.c.l.b16 %v1460
    %v1499 = vunpack.c.l.b16 %v1461
    %v1500 = vunpack.c.l.b16 %v1462
    %v1501 = vunpack.c.l.b16 %v1463
    %v1502 = vpack.c.b16 %v1487, %v1486
    %v1503 = vpack.c.b16 %v1489, %v1488
    %v1504 = vpack.c.b16 %v1491, %v1490
    %v1505 = vpack.c.b16 %v1493, %v1492
    %v1506 = vpack.c.b16 %v1495, %v1494
    %v1507 = vpack.c.b16 %v1497, %v1496
    %v1508 = vpack.c.b16 %v1499, %v1498
    %v1509 = vpack.c.b16 %v1501, %v1500
    %1518 = vmatprep.subr.bf16.mxu0 0
    %1519 = vmatpush1.bf16.msra.mxu0 %v1509
    %1520 = vmatprep.subr.bf16.mxu0 0
    %1521 = vmatpush1.bf16.msra.mxu0 %v1508
    %1522 = vmatprep.subr.bf16.mxu0 0
    %1523 = vmatpush1.bf16.msra.mxu0 %v1507
    %1524 = vmatprep.subr.bf16.mxu0 0
    %1525 = vmatpush1.bf16.msra.mxu0 %v1506
    %1526 = vmatprep.subr.bf16.mxu0 0
    %1527 = vmatpush1.bf16.msra.mxu0 %v1505
    %1528 = vmatprep.subr.bf16.mxu0 0
    %1529 = vmatpush1.bf16.msra.mxu0 %v1504
    %1530 = vmatprep.subr.bf16.mxu0 0
    %1531 = vmatpush1.bf16.msra.mxu0 %v1503
    %1532 = vmatprep.subr.bf16.mxu0 0
    %1533 = vmatpush1.bf16.msra.mxu0 %v1502
    %1534 = vmatprep.subr.bf16.mxu0 0
    %1535 = vmatpush2.bf16.msra.mxu0 0
    %1536 = vmatprep.subr.bf16.mxu0 0
    %1537 = vmatpush2.bf16.msra.mxu0 0
    %1538 = vmatprep.subr.bf16.mxu0 0
    %1539 = vmatpush2.bf16.msra.mxu0 0
    %1540 = vmatprep.subr.bf16.mxu0 0
    %1541 = vmatpush2.bf16.msra.mxu0 0
    %1542 = vmatprep.subr.bf16.mxu0 0
    %1543 = vmatpush2.bf16.msra.mxu0 0
    %1544 = vmatprep.subr.bf16.mxu0 0
    %1545 = vmatpush2.bf16.msra.mxu0 0
    %1546 = vmatprep.subr.bf16.mxu0 0
    %1547 = vmatpush2.bf16.msra.mxu0 0
    %1548 = vmatprep.subr.bf16.mxu0 0
    %1549 = vmatpush2.bf16.msra.mxu0 0
    %1550 = vmatprep.mubr.bf16.mxu0 0
    %1551 = vmatmul.mubr.bf16.gmra.mxu0 %v1464
    %v1552 = vpop.f32.mrf.mxu0
    %v1553 = vadd.f32 %v1469, %v1552
    %v1554 = vpop.f32.mrf.mxu0
    %v1555 = vpop.f32.mrf.mxu0
    %v1556 = vpop.f32.mrf.mxu0
    %1557 = vdwg.mxu0
    %1558 = vst [vmem:[%s4] sm:$0xff] %v1553
    // Predicated region
    $region34: #{baseline_classifier_forward.1} parent=1 // pred_check
      _
    $region35: #{baseline_classifier_forward.1} parent=1 // pred_check_branch
      %1560 = sbr.rel (0) target = $region37
    $region36: #{baseline_classifier_forward.1} parent=1 // pred_region
      _
    $region37: #{baseline_classifier_forward.1} parent=1 // pred_fallthru
      _
    // Predicated region
    $region38: #{baseline_classifier_forward.1} parent=1 // pred_check
      _
    $region39: #{baseline_classifier_forward.1} parent=1 // pred_check_branch
      %1562 = sbr.rel (0) target = $region41
    $region40: #{baseline_classifier_forward.1} parent=1 // pred_region
      _
    $region41: #{baseline_classifier_forward.1} parent=1 // pred_fallthru
      _
    %1563 = vsyncpa [#allocation3], 1
    %1564 = vsyncpa [#allocation5], 1
    %1565 = vsyncpa [#allocation8], 1

</llo_original>
